<compile_context>
chip_gen: v5e
topology: v5e:2x2
jax: 0.10.0
libtpu: 0.0.40
codegen_flags: <defaults>
</compile_context>

<pallas_src>
import numpy as np
import jax
import jax.numpy as jnp
from jax.experimental import pallas as pl
from jax.experimental.pallas import tpu as pltpu

BT = 8                                                  # images / grid step (mult of 8)
_PAR13 = (0, 2, 4, 6, 8, 10, 12, 1, 3, 5, 7, 9, 11)     # parity-split order of 0..12


# ---------------------------------------------------------------------------
# Fused kernel (one grid step == BT images)
# ---------------------------------------------------------------------------
def _make_cnn_kernel(bt):
    C1, C2 = 16, 32

    def kernel(lhs_ref, w1_ref, b1_ref, w2_ref, b2_ref, w3_ref, b3_ref,
               w4_ref, b4_ref, out_ref, a1_s, q_s):
        f32 = jnp.float32

        # ---- conv1: one structured bf16 matmul + bias + ReLU ----------------
        # rows = (oi parity pos, image), lanes = (oj parity pos, channel)
        a1 = jnp.dot(lhs_ref[0], w1_ref[...], preferred_element_type=f32)
        a1_s[...] = jnp.maximum(a1 + b1_ref[...], 0.0)               # [13*bt, 208]

        # ---- MaxPool(2, stride 1) along W: lane-shifted slices --------------
        ev_lo = a1_s[:, 0:6 * C1]            # oj = 0,2,...,10
        ev_hi = a1_s[:, C1:7 * C1]           # oj = 2,4,...,12
        odd   = a1_s[:, 7 * C1:13 * C1]      # oj = 1,3,...,11
        pw_e = jnp.maximum(ev_lo, odd)       # pooled col even   [13*bt, 96]
        pw_o = jnp.maximum(odd, ev_hi)       # pooled col odd    [13*bt, 96]

        # ---- MaxPool(2, stride 1) along H: 8-aligned sublane slices ---------
        # stored H-parity split so every conv2 tap is a contiguous slice
        q_s[0] = jnp.maximum(pw_e[0:6 * bt], pw_e[7 * bt:13 * bt])   # i even, j even
        q_s[1] = jnp.maximum(pw_o[0:6 * bt], pw_o[7 * bt:13 * bt])   # i even, j odd
        q_s[2] = jnp.maximum(pw_e[7 * bt:13 * bt], pw_e[bt:7 * bt])  # i odd,  j even
        q_s[3] = jnp.maximum(pw_o[7 * bt:13 * bt], pw_o[bt:7 * bt])  # i odd,  j odd

        # ---- conv2: 8 accumulated structured matmuls (ki x W-parity) --------
        acc2 = jnp.zeros((5 * bt, 5 * C2), f32)
        for ki in range(4):
            hh, hpar = ki // 2, ki % 2
            for wpar in range(2):
                lhs = q_s[2 * hpar + wpar, hh * bt:(hh + 5) * bt, :]  # [5*bt, 96]
                acc2 = acc2 + jnp.dot(lhs, w2_ref[2 * ki + wpar],
                                      preferred_element_type=f32)
        a2 = jnp.maximum(acc2 + b2_ref[...], 0.0)                    # [5*bt, 160]

        # ---- MaxPool(2, stride 1) on conv2 output ---------------------------
        pw2 = jnp.maximum(a2[:, 0:4 * C2], a2[:, C2:5 * C2])         # [5*bt, 128]
        p2 = jnp.maximum(pw2[0:4 * bt], pw2[bt:5 * bt])              # [4*bt, 128]

        # ---- fc1: 4 accumulated [bt,128]@[128,32] matmuls + ReLU ------------
        z1 = jnp.zeros((bt, 32), f32)
        for i2 in range(4):
            z1 = z1 + jnp.dot(p2[i2 * bt:(i2 + 1) * bt, :], w3_ref[i2],
                              preferred_element_type=f32)
        z1 = jnp.maximum(z1 + b3_ref[...], 0.0)                      # [bt, 32]

        # ---- fc2 -> lane-dense (bt, 128) logits tile ------------------------
        out_ref[...] = (jnp.dot(z1, w4_ref[...], preferred_element_type=f32)
                        + b4_ref[...])

    return kernel


# ---------------------------------------------------------------------------
# Host-side packing
# ---------------------------------------------------------------------------
def _pack_input(x, bt):
    """x: [B,1,28,28] f32 (B multiple of bt) -> [B//bt, 13*bt, 256] bf16 bands.

    Row (p, img) of a block holds the padded 8x32 input band for output row
    oi = _PAR13[p] (H parity-split), flattened as (ki, iw)."""
    B = x.shape[0]
    xp = jnp.pad(x[:, 0], ((0, 0), (2, 2), (2, 2)))                  # [B, 32, 32]
    bands = jnp.stack([xp[:, 2 * oi:2 * oi + 8, :].reshape(B, 256)
                       for oi in _PAR13], axis=1)                    # [B, 13, 256]
    nb = B // bt
    bands = bands.reshape(nb, bt, 13, 256).transpose(0, 2, 1, 3)
    return bands.reshape(nb, 13 * bt, 256).astype(jnp.bfloat16)


def pack_params(params):
    w1 = np.asarray(params["w1"], np.float32)   # [16,1,8,8]
    b1 = np.asarray(params["b1"], np.float32)
    w2 = np.asarray(params["w2"], np.float32)   # [32,16,4,4]
    b2 = np.asarray(params["b2"], np.float32)
    w3 = np.asarray(params["w3"], np.float32)   # [32,512]  (out, c2*16 + h*4 + w)
    b3 = np.asarray(params["b3"], np.float32)
    w4 = np.asarray(params["w4"], np.float32)   # [10,32]
    b4 = np.asarray(params["b4"], np.float32)

    # conv1 structured weight [256, 13*16]: row = ki*32 + iw, col = p*16 + c
    # (oj = _PAR13[p]); nonzero iff iw = 2*oj + kj for some kj in 0..7.
    W1 = np.zeros((256, 13 * 16), np.float32)
    for p, oj in enumerate(_PAR13):
        for ki in range(8):
            for kj in range(8):
                W1[ki * 32 + 2 * oj + kj, p * 16:(p + 1) * 16] = w1[:, 0, ki, kj]
    B1 = np.tile(b1, 13)[None, :]                                    # [1, 208]

    # conv2 structured weights [8, 96, 160], t = 2*ki + wpar:
    # row = m*16 + c (m = W parity-half idx), col = oj2*32 + c2,
    # nonzero when m - oj2 in {0,1} with kj = 2*(m - oj2) + wpar.
    W2 = np.zeros((8, 6 * 16, 5 * 32), np.float32)
    for ki in range(4):
        for wpar in range(2):
            t = 2 * ki + wpar
            for oj2 in range(5):
                for dm in range(2):
                    m = oj2 + dm
                    if m > 5:
                        continue
                    kj = 2 * dm + wpar
                    W2[t, m * 16:(m + 1) * 16, oj2 * 32:(oj2 + 1) * 32] = \
                        w2[:, :, ki, kj].T
    B2 = np.tile(b2, 5)[None, :]                                     # [1, 160]

    # fc1 as 4 [128, 32] matrices (one per pooled row i2); row = j2*32 + c2.
    w3r = w3.reshape(32, 32, 4, 4)                                   # [out, c2, h, w]
    W3 = np.zeros((4, 128, 32), np.float32)
    for i2 in range(4):
        for j2 in range(4):
            W3[i2, j2 * 32:(j2 + 1) * 32, :] = w3r[:, :, i2, j2].T
    B3 = b3[None, :]

    # fc2 padded to 128 output lanes (cols 10.. are zeros).
    W4 = np.zeros((32, 128), np.float32)
    W4[:, :10] = w4.T
    B4 = np.zeros((1, 128), np.float32)
    B4[0, :10] = b4

    return {
        "w1": jnp.asarray(W1, jnp.bfloat16), "b1": jnp.asarray(B1),
        "w2": jnp.asarray(W2), "b2": jnp.asarray(B2),
        "w3": jnp.asarray(W3), "b3": jnp.asarray(B3),
        "w4": jnp.asarray(W4), "b4": jnp.asarray(B4),
    }


# ---------------------------------------------------------------------------
# Forward wrapper
# ---------------------------------------------------------------------------
def cnn_forward(packed, x, bt=BT):
    B = x.shape[0]
    b_pad = ((B + bt - 1) // bt) * bt
    if b_pad != B:
        x = jnp.pad(x, ((0, b_pad - B), (0, 0), (0, 0), (0, 0)))
    nb = b_pad // bt
    lhs1 = _pack_input(x, bt)                                        # [nb, 13*bt, 256]

    def full(nd):
        return lambda b: (0,) * nd

    grid_spec = pltpu.PrefetchScalarGridSpec(
        num_scalar_prefetch=0,
        grid=(nb,),
        in_specs=[
            pl.BlockSpec((1, 13 * bt, 256), lambda b: (b, 0, 0)),    # input bands
            pl.BlockSpec((256, 208), full(2)),                       # conv1 W (bf16)
            pl.BlockSpec((1, 208), full(2)),
            pl.BlockSpec((8, 96, 160), full(3)),                     # conv2 W
            pl.BlockSpec((1, 160), full(2)),
            pl.BlockSpec((4, 128, 32), full(3)),                     # fc1 W
            pl.BlockSpec((1, 32), full(2)),
            pl.BlockSpec((32, 128), full(2)),                        # fc2 W (padded)
            pl.BlockSpec((1, 128), full(2)),
        ],
        out_specs=pl.BlockSpec((bt, 128), lambda b: (b, 0)),
        scratch_shapes=[
            pltpu.VMEM((13 * bt, 13 * 16), jnp.float32),   # conv1 + ReLU
            pltpu.VMEM((4, 6 * bt, 6 * 16), jnp.float32),  # pooled, H/W parity split
        ],
    )

    flops_step = 2 * (13 * bt * 256 * 208 + 8 * 5 * bt * 96 * 160
                      + 4 * bt * 128 * 32 + bt * 32 * 128)
    weight_bytes = (256 * 208 * 2 + (208 + 8 * 96 * 160 + 160
                                     + 4 * 128 * 32 + 32 + 32 * 128 + 128) * 4)
    bytes_acc = int(lhs1.size * 2 + nb * bt * 128 * 4 + weight_bytes)

    out = pl.pallas_call(
        _make_cnn_kernel(bt),
        out_shape=jax.ShapeDtypeStruct((nb * bt, 128), jnp.float32),
        grid_spec=grid_spec,
        compiler_params=pltpu.CompilerParams(
            dimension_semantics=("parallel",),
            vmem_limit_bytes=32 * 1024 * 1024),
        cost_estimate=pl.CostEstimate(flops=nb * flops_step, transcendentals=0,
                                      bytes_accessed=bytes_acc),
    )(lhs1, packed["w1"], packed["b1"], packed["w2"], packed["b2"],
      packed["w3"], packed["b3"], packed["w4"], packed["b4"])
    return out[:B, :10]


# ---------------------------------------------------------------------------
# Parameters + pure-JAX reference (for correctness check)
# ---------------------------------------------------------------------------
def init_params(key):
    def uniform(k, shape, fan_in):
        bound = 1.0 / np.sqrt(fan_in)
        return jax.random.uniform(k, shape, jnp.float32, -bound, bound)

    ks = jax.random.split(key, 8)
    return {
        "w1": uniform(ks[0], (16, 1, 8, 8), 1 * 8 * 8),
        "b1": uniform(ks[1], (16,), 1 * 8 * 8),
        "w2": uniform(ks[2], (32, 16, 4, 4), 16 * 4 * 4),
        "b2": uniform(ks[3], (32,), 16 * 4 * 4),
        "w3": uniform(ks[4], (32, 32 * 4 * 4), 32 * 4 * 4),
        "b3": uniform(ks[5], (32,), 32 * 4 * 4),
        "w4": uniform(ks[6], (10, 32), 32),
        "b4": uniform(ks[7], (10,), 32),
    }


def ref_forward(params, x):
    dn = ("NCHW", "OIHW", "NCHW")
    hp = jax.lax.Precision.HIGHEST
    x = jax.lax.conv_general_dilated(x, params["w1"], (2, 2), [(2, 2), (2, 2)],
                                     dimension_numbers=dn, precision=hp)
    x = jnp.maximum(x + params["b1"][None, :, None, None], 0.0)
    x = jax.lax.reduce_window(x, -jnp.inf, jax.lax.max, (1, 1, 2, 2), (1, 1, 1, 1), "VALID")
    x = jax.lax.conv_general_dilated(x, params["w2"], (2, 2), [(0, 0), (0, 0)],
                                     dimension_numbers=dn, precision=hp)
    x = jnp.maximum(x + params["b2"][None, :, None, None], 0.0)
    x = jax.lax.reduce_window(x, -jnp.inf, jax.lax.max, (1, 1, 2, 2), (1, 1, 1, 1), "VALID")
    x = x.reshape(x.shape[0], -1)
    x = jnp.maximum(jnp.dot(x, params["w3"].T, precision=hp) + params["b3"], 0.0)
    x = jnp.dot(x, params["w4"].T, precision=hp) + params["b4"]
    return x


if __name__ == "__main__":
    key = jax.random.PRNGKey(0)
    kp, kx = jax.random.split(key)
    params = init_params(kp)
    # 28x28 input is required by Linear(32*4*4); B=16 -> grid of 2 steps (BT=8).
    x = jax.random.normal(kx, (16, 1, 28, 28), jnp.float32)

    packed = pack_params(params)
    out = jax.block_until_ready(jax.jit(cnn_forward)(packed, x))
    assert out.shape == (16, 10), out.shape

    ref = jax.block_until_ready(jax.jit(ref_forward)(params, x))
    # bf16 input / conv1-weight storage + default MXU precision -> relaxed tol
    np.testing.assert_allclose(np.asarray(out), np.asarray(ref), rtol=2e-2, atol=2e-2)

    print("KERNEL_OK")
</pallas_src>

<mosaic_0001>
module attributes {stable_mosaic.version = 11 : i64} {
  func.func @kernel(%arg0: i32, %arg1: memref<1x104x256xbf16, #tpu.memory_space<vmem>>, %arg2: memref<256x208xbf16, #tpu.memory_space<vmem>>, %arg3: memref<1x208xf32, #tpu.memory_space<vmem>>, %arg4: memref<8x96x160xf32, #tpu.memory_space<vmem>>, %arg5: memref<1x160xf32, #tpu.memory_space<vmem>>, %arg6: memref<4x128x32xf32, #tpu.memory_space<vmem>>, %arg7: memref<1x32xf32, #tpu.memory_space<vmem>>, %arg8: memref<32x128xf32, #tpu.memory_space<vmem>>, %arg9: memref<1x128xf32, #tpu.memory_space<vmem>>, %arg10: memref<8x128xf32, #tpu.memory_space<vmem>>, %arg11: memref<104x208xf32, #tpu.memory_space<vmem>>, %arg12: memref<4x48x96xf32, #tpu.memory_space<vmem>>) attributes {dimension_semantics = [#tpu.dimension_semantics<parallel>], iteration_bounds = array<i64: 2>, scalar_prefetch = 0 : i64, scratch_operands = 2 : i64, tpu.core_type = #tpu.core_type<tc>, window_params = [{transform_indices = @transform_0, window_bounds = array<i64: 1, 104, 256>}, {pipeline_mode = #tpu.pipeline_mode<synchronous>, transform_indices = @transform_1, window_bounds = array<i64: 256, 208>}, {pipeline_mode = #tpu.pipeline_mode<synchronous>, transform_indices = @transform_2, window_bounds = array<i64: 1, 208>}, {pipeline_mode = #tpu.pipeline_mode<synchronous>, transform_indices = @transform_3, window_bounds = array<i64: 8, 96, 160>}, {pipeline_mode = #tpu.pipeline_mode<synchronous>, transform_indices = @transform_4, window_bounds = array<i64: 1, 160>}, {pipeline_mode = #tpu.pipeline_mode<synchronous>, transform_indices = @transform_5, window_bounds = array<i64: 4, 128, 32>}, {pipeline_mode = #tpu.pipeline_mode<synchronous>, transform_indices = @transform_6, window_bounds = array<i64: 1, 32>}, {pipeline_mode = #tpu.pipeline_mode<synchronous>, transform_indices = @transform_7, window_bounds = array<i64: 32, 128>}, {pipeline_mode = #tpu.pipeline_mode<synchronous>, transform_indices = @transform_8, window_bounds = array<i64: 1, 128>}, {transform_indices = @transform_9, window_bounds = array<i64: 8, 128>}]} {
    %c0 = arith.constant 0 : index
    %c0_0 = arith.constant 0 : index
    %c0_1 = arith.constant 0 : index
    %0 = vector.load %arg1[%c0, %c0_0, %c0_1] : memref<1x104x256xbf16, #tpu.memory_space<vmem>>, vector<1x104x256xbf16>
    %1 = vector.shape_cast %0 : vector<1x104x256xbf16> to vector<104x256xbf16>
    %c0_2 = arith.constant 0 : index
    %c0_3 = arith.constant 0 : index
    %2 = vector.load %arg2[%c0_2, %c0_3] : memref<256x208xbf16, #tpu.memory_space<vmem>>, vector<256x208xbf16>
    %cst = arith.constant dense<0.000000e+00> : vector<104x208xf32>
    %3 = tpu.matmul %1, %2, %cst {dimension_numbers = #tpu.dot_dimension_numbers<[1], [0], [0], [1], [0, 0, 1, 1], [], []>} : vector<104x256xbf16>, vector<256x208xbf16>, vector<104x208xf32> -> vector<104x208xf32>
    %c0_4 = arith.constant 0 : index
    %c0_5 = arith.constant 0 : index
    %4 = vector.load %arg3[%c0_4, %c0_5] : memref<1x208xf32, #tpu.memory_space<vmem>>, vector<1x208xf32>
    %5 = vector.broadcast %4 : vector<1x208xf32> to vector<104x208xf32>
    %6 = arith.addf %3, %5 : vector<104x208xf32>
    %cst_6 = arith.constant 0.000000e+00 : f32
    %7 = vector.broadcast %cst_6 : f32 to vector<104x208xf32>
    %8 = arith.maximumf %6, %7 : vector<104x208xf32>
    %c0_7 = arith.constant 0 : index
    %c0_8 = arith.constant 0 : index
    %9 = vector.load %arg11[%c0_7, %c0_8] : memref<104x208xf32, #tpu.memory_space<vmem>>, vector<104x208xf32>
    tpu.vector_store %arg11[%c0_7, %c0_8], %8 {strides = array<i32>} : memref<104x208xf32, #tpu.memory_space<vmem>>, vector<104x208xf32>,
    %c0_9 = arith.constant 0 : index
    %c0_10 = arith.constant 0 : index
    %10 = vector.load %arg11[%c0_9, %c0_10] : memref<104x208xf32, #tpu.memory_space<vmem>>, vector<104x96xf32>
    %c0_11 = arith.constant 0 : index
    %c16 = arith.constant 16 : index
    %11 = vector.load %arg11[%c0_11, %c16] : memref<104x208xf32, #tpu.memory_space<vmem>>, vector<104x96xf32>
    %c0_12 = arith.constant 0 : index
    %c112 = arith.constant 112 : index
    %12 = vector.load %arg11[%c0_12, %c112] : memref<104x208xf32, #tpu.memory_space<vmem>>, vector<104x96xf32>
    %13 = arith.maximumf %10, %12 : vector<104x96xf32>
    %14 = arith.maximumf %12, %11 : vector<104x96xf32>
    %15 = vector.extract_strided_slice %13 {offsets = [0, 0], sizes = [48, 96], strides = [1, 1]} : vector<104x96xf32> to vector<48x96xf32>
    %16 = vector.extract_strided_slice %13 {offsets = [56, 0], sizes = [48, 96], strides = [1, 1]} : vector<104x96xf32> to vector<48x96xf32>
    %17 = arith.maximumf %15, %16 : vector<48x96xf32>
    %c0_13 = arith.constant 0 : index
    %c0_14 = arith.constant 0 : index
    %c0_15 = arith.constant 0 : index
    %18 = vector.load %arg12[%c0_13, %c0_14, %c0_15] : memref<4x48x96xf32, #tpu.memory_space<vmem>>, vector<1x48x96xf32>
    %19 = vector.shape_cast %18 : vector<1x48x96xf32> to vector<48x96xf32>
    %20 = vector.shape_cast %17 : vector<48x96xf32> to vector<1x48x96xf32>
    tpu.vector_store %arg12[%c0_13, %c0_14, %c0_15], %20 {strides = array<i32>} : memref<4x48x96xf32, #tpu.memory_space<vmem>>, vector<1x48x96xf32>,
    %21 = vector.extract_strided_slice %14 {offsets = [0, 0], sizes = [48, 96], strides = [1, 1]} : vector<104x96xf32> to vector<48x96xf32>
    %22 = vector.extract_strided_slice %14 {offsets = [56, 0], sizes = [48, 96], strides = [1, 1]} : vector<104x96xf32> to vector<48x96xf32>
    %23 = arith.maximumf %21, %22 : vector<48x96xf32>
    %c1 = arith.constant 1 : index
    %c0_16 = arith.constant 0 : index
    %c0_17 = arith.constant 0 : index
    %24 = vector.load %arg12[%c1, %c0_16, %c0_17] : memref<4x48x96xf32, #tpu.memory_space<vmem>>, vector<1x48x96xf32>
    %25 = vector.shape_cast %24 : vector<1x48x96xf32> to vector<48x96xf32>
    %26 = vector.shape_cast %23 : vector<48x96xf32> to vector<1x48x96xf32>
    tpu.vector_store %arg12[%c1, %c0_16, %c0_17], %26 {strides = array<i32>} : memref<4x48x96xf32, #tpu.memory_space<vmem>>, vector<1x48x96xf32>,
    %27 = vector.extract_strided_slice %13 {offsets = [56, 0], sizes = [48, 96], strides = [1, 1]} : vector<104x96xf32> to vector<48x96xf32>
    %28 = vector.extract_strided_slice %13 {offsets = [8, 0], sizes = [48, 96], strides = [1, 1]} : vector<104x96xf32> to vector<48x96xf32>
    %29 = arith.maximumf %27, %28 : vector<48x96xf32>
    %c2 = arith.constant 2 : index
    %c0_18 = arith.constant 0 : index
    %c0_19 = arith.constant 0 : index
    %30 = vector.load %arg12[%c2, %c0_18, %c0_19] : memref<4x48x96xf32, #tpu.memory_space<vmem>>, vector<1x48x96xf32>
    %31 = vector.shape_cast %30 : vector<1x48x96xf32> to vector<48x96xf32>
    %32 = vector.shape_cast %29 : vector<48x96xf32> to vector<1x48x96xf32>
    tpu.vector_store %arg12[%c2, %c0_18, %c0_19], %32 {strides = array<i32>} : memref<4x48x96xf32, #tpu.memory_space<vmem>>, vector<1x48x96xf32>,
    %33 = vector.extract_strided_slice %14 {offsets = [56, 0], sizes = [48, 96], strides = [1, 1]} : vector<104x96xf32> to vector<48x96xf32>
    %34 = vector.extract_strided_slice %14 {offsets = [8, 0], sizes = [48, 96], strides = [1, 1]} : vector<104x96xf32> to vector<48x96xf32>
    %35 = arith.maximumf %33, %34 : vector<48x96xf32>
    %c3 = arith.constant 3 : index
    %c0_20 = arith.constant 0 : index
    %c0_21 = arith.constant 0 : index
    %36 = vector.load %arg12[%c3, %c0_20, %c0_21] : memref<4x48x96xf32, #tpu.memory_space<vmem>>, vector<1x48x96xf32>
    %37 = vector.shape_cast %36 : vector<1x48x96xf32> to vector<48x96xf32>
    %38 = vector.shape_cast %35 : vector<48x96xf32> to vector<1x48x96xf32>
    tpu.vector_store %arg12[%c3, %c0_20, %c0_21], %38 {strides = array<i32>} : memref<4x48x96xf32, #tpu.memory_space<vmem>>, vector<1x48x96xf32>,
    %cst_22 = arith.constant 0.000000e+00 : f32
    %39 = vector.broadcast %cst_22 : f32 to vector<40x160xf32>
    %c0_23 = arith.constant 0 : index
    %c0_24 = arith.constant 0 : index
    %c0_25 = arith.constant 0 : index
    %40 = vector.load %arg12[%c0_23, %c0_24, %c0_25] : memref<4x48x96xf32, #tpu.memory_space<vmem>>, vector<1x40x96xf32>
    %41 = vector.shape_cast %40 : vector<1x40x96xf32> to vector<40x96xf32>
    %c0_26 = arith.constant 0 : index
    %c0_27 = arith.constant 0 : index
    %c0_28 = arith.constant 0 : index
    %42 = vector.load %arg4[%c0_26, %c0_27, %c0_28] : memref<8x96x160xf32, #tpu.memory_space<vmem>>, vector<1x96x160xf32>
    %43 = vector.shape_cast %42 : vector<1x96x160xf32> to vector<96x160xf32>
    %cst_29 = arith.constant dense<0.000000e+00> : vector<40x160xf32>
    %44 = tpu.matmul %41, %43, %cst_29 {dimension_numbers = #tpu.dot_dimension_numbers<[1], [0], [0], [1], [0, 0, 1, 1], [], []>} : vector<40x96xf32>, vector<96x160xf32>, vector<40x160xf32> -> vector<40x160xf32>
    %45 = arith.addf %39, %44 : vector<40x160xf32>
    %c1_30 = arith.constant 1 : index
    %c0_31 = arith.constant 0 : index
    %c0_32 = arith.constant 0 : index
    %46 = vector.load %arg12[%c1_30, %c0_31, %c0_32] : memref<4x48x96xf32, #tpu.memory_space<vmem>>, vector<1x40x96xf32>
    %47 = vector.shape_cast %46 : vector<1x40x96xf32> to vector<40x96xf32>
    %c1_33 = arith.constant 1 : index
    %c0_34 = arith.constant 0 : index
    %c0_35 = arith.constant 0 : index
    %48 = vector.load %arg4[%c1_33, %c0_34, %c0_35] : memref<8x96x160xf32, #tpu.memory_space<vmem>>, vector<1x96x160xf32>
    %49 = vector.shape_cast %48 : vector<1x96x160xf32> to vector<96x160xf32>
    %cst_36 = arith.constant dense<0.000000e+00> : vector<40x160xf32>
    %50 = tpu.matmul %47, %49, %cst_36 {dimension_numbers = #tpu.dot_dimension_numbers<[1], [0], [0], [1], [0, 0, 1, 1], [], []>} : vector<40x96xf32>, vector<96x160xf32>, vector<40x160xf32> -> vector<40x160xf32>
    %51 = arith.addf %45, %50 : vector<40x160xf32>
    %c2_37 = arith.constant 2 : index
    %c0_38 = arith.constant 0 : index
    %c0_39 = arith.constant 0 : index
    %52 = vector.load %arg12[%c2_37, %c0_38, %c0_39] : memref<4x48x96xf32, #tpu.memory_space<vmem>>, vector<1x40x96xf32>
    %53 = vector.shape_cast %52 : vector<1x40x96xf32> to vector<40x96xf32>
    %c2_40 = arith.constant 2 : index
    %c0_41 = arith.constant 0 : index
    %c0_42 = arith.constant 0 : index
    %54 = vector.load %arg4[%c2_40, %c0_41, %c0_42] : memref<8x96x160xf32, #tpu.memory_space<vmem>>, vector<1x96x160xf32>
    %55 = vector.shape_cast %54 : vector<1x96x160xf32> to vector<96x160xf32>
    %cst_43 = arith.constant dense<0.000000e+00> : vector<40x160xf32>
    %56 = tpu.matmul %53, %55, %cst_43 {dimension_numbers = #tpu.dot_dimension_numbers<[1], [0], [0], [1], [0, 0, 1, 1], [], []>} : vector<40x96xf32>, vector<96x160xf32>, vector<40x160xf32> -> vector<40x160xf32>
    %57 = arith.addf %51, %56 : vector<40x160xf32>
    %c3_44 = arith.constant 3 : index
    %c0_45 = arith.constant 0 : index
    %c0_46 = arith.constant 0 : index
    %58 = vector.load %arg12[%c3_44, %c0_45, %c0_46] : memref<4x48x96xf32, #tpu.memory_space<vmem>>, vector<1x40x96xf32>
    %59 = vector.shape_cast %58 : vector<1x40x96xf32> to vector<40x96xf32>
    %c3_47 = arith.constant 3 : index
    %c0_48 = arith.constant 0 : index
    %c0_49 = arith.constant 0 : index
    %60 = vector.load %arg4[%c3_47, %c0_48, %c0_49] : memref<8x96x160xf32, #tpu.memory_space<vmem>>, vector<1x96x160xf32>
    %61 = vector.shape_cast %60 : vector<1x96x160xf32> to vector<96x160xf32>
    %cst_50 = arith.constant dense<0.000000e+00> : vector<40x160xf32>
    %62 = tpu.matmul %59, %61, %cst_50 {dimension_numbers = #tpu.dot_dimension_numbers<[1], [0], [0], [1], [0, 0, 1, 1], [], []>} : vector<40x96xf32>, vector<96x160xf32>, vector<40x160xf32> -> vector<40x160xf32>
    %63 = arith.addf %57, %62 : vector<40x160xf32>
    %c0_51 = arith.constant 0 : index
    %c8 = arith.constant 8 : index
    %c0_52 = arith.constant 0 : index
    %64 = vector.load %arg12[%c0_51, %c8, %c0_52] : memref<4x48x96xf32, #tpu.memory_space<vmem>>, vector<1x40x96xf32>
    %65 = vector.shape_cast %64 : vector<1x40x96xf32> to vector<40x96xf32>
    %c4 = arith.constant 4 : index
    %c0_53 = arith.constant 0 : index
    %c0_54 = arith.constant 0 : index
    %66 = vector.load %arg4[%c4, %c0_53, %c0_54] : memref<8x96x160xf32, #tpu.memory_space<vmem>>, vector<1x96x160xf32>
    %67 = vector.shape_cast %66 : vector<1x96x160xf32> to vector<96x160xf32>
    %cst_55 = arith.constant dense<0.000000e+00> : vector<40x160xf32>
    %68 = tpu.matmul %65, %67, %cst_55 {dimension_numbers = #tpu.dot_dimension_numbers<[1], [0], [0], [1], [0, 0, 1, 1], [], []>} : vector<40x96xf32>, vector<96x160xf32>, vector<40x160xf32> -> vector<40x160xf32>
    %69 = arith.addf %63, %68 : vector<40x160xf32>
    %c1_56 = arith.constant 1 : index
    %c8_57 = arith.constant 8 : index
    %c0_58 = arith.constant 0 : index
    %70 = vector.load %arg12[%c1_56, %c8_57, %c0_58] : memref<4x48x96xf32, #tpu.memory_space<vmem>>, vector<1x40x96xf32>
    %71 = vector.shape_cast %70 : vector<1x40x96xf32> to vector<40x96xf32>
    %c5 = arith.constant 5 : index
    %c0_59 = arith.constant 0 : index
    %c0_60 = arith.constant 0 : index
    %72 = vector.load %arg4[%c5, %c0_59, %c0_60] : memref<8x96x160xf32, #tpu.memory_space<vmem>>, vector<1x96x160xf32>
    %73 = vector.shape_cast %72 : vector<1x96x160xf32> to vector<96x160xf32>
    %cst_61 = arith.constant dense<0.000000e+00> : vector<40x160xf32>
    %74 = tpu.matmul %71, %73, %cst_61 {dimension_numbers = #tpu.dot_dimension_numbers<[1], [0], [0], [1], [0, 0, 1, 1], [], []>} : vector<40x96xf32>, vector<96x160xf32>, vector<40x160xf32> -> vector<40x160xf32>
    %75 = arith.addf %69, %74 : vector<40x160xf32>
    %c2_62 = arith.constant 2 : index
    %c8_63 = arith.constant 8 : index
    %c0_64 = arith.constant 0 : index
    %76 = vector.load %arg12[%c2_62, %c8_63, %c0_64] : memref<4x48x96xf32, #tpu.memory_space<vmem>>, vector<1x40x96xf32>
    %77 = vector.shape_cast %76 : vector<1x40x96xf32> to vector<40x96xf32>
    %c6 = arith.constant 6 : index
    %c0_65 = arith.constant 0 : index
    %c0_66 = arith.constant 0 : index
    %78 = vector.load %arg4[%c6, %c0_65, %c0_66] : memref<8x96x160xf32, #tpu.memory_space<vmem>>, vector<1x96x160xf32>
    %79 = vector.shape_cast %78 : vector<1x96x160xf32> to vector<96x160xf32>
    %cst_67 = arith.constant dense<0.000000e+00> : vector<40x160xf32>
    %80 = tpu.matmul %77, %79, %cst_67 {dimension_numbers = #tpu.dot_dimension_numbers<[1], [0], [0], [1], [0, 0, 1, 1], [], []>} : vector<40x96xf32>, vector<96x160xf32>, vector<40x160xf32> -> vector<40x160xf32>
    %81 = arith.addf %75, %80 : vector<40x160xf32>
    %c3_68 = arith.constant 3 : index
    %c8_69 = arith.constant 8 : index
    %c0_70 = arith.constant 0 : index
    %82 = vector.load %arg12[%c3_68, %c8_69, %c0_70] : memref<4x48x96xf32, #tpu.memory_space<vmem>>, vector<1x40x96xf32>
    %83 = vector.shape_cast %82 : vector<1x40x96xf32> to vector<40x96xf32>
    %c7 = arith.constant 7 : index
    %c0_71 = arith.constant 0 : index
    %c0_72 = arith.constant 0 : index
    %84 = vector.load %arg4[%c7, %c0_71, %c0_72] : memref<8x96x160xf32, #tpu.memory_space<vmem>>, vector<1x96x160xf32>
    %85 = vector.shape_cast %84 : vector<1x96x160xf32> to vector<96x160xf32>
    %cst_73 = arith.constant dense<0.000000e+00> : vector<40x160xf32>
    %86 = tpu.matmul %83, %85, %cst_73 {dimension_numbers = #tpu.dot_dimension_numbers<[1], [0], [0], [1], [0, 0, 1, 1], [], []>} : vector<40x96xf32>, vector<96x160xf32>, vector<40x160xf32> -> vector<40x160xf32>
    %87 = arith.addf %81, %86 : vector<40x160xf32>
    %c0_74 = arith.constant 0 : index
    %c0_75 = arith.constant 0 : index
    %88 = vector.load %arg5[%c0_74, %c0_75] : memref<1x160xf32, #tpu.memory_space<vmem>>, vector<1x160xf32>
    %89 = vector.broadcast %88 : vector<1x160xf32> to vector<40x160xf32>
    %90 = arith.addf %87, %89 : vector<40x160xf32>
    %cst_76 = arith.constant 0.000000e+00 : f32
    %91 = vector.broadcast %cst_76 : f32 to vector<40x160xf32>
    %92 = arith.maximumf %90, %91 : vector<40x160xf32>
    %93 = vector.extract_strided_slice %92 {offsets = [0, 0], sizes = [40, 128], strides = [1, 1]} : vector<40x160xf32> to vector<40x128xf32>
    %94 = vector.extract_strided_slice %92 {offsets = [0, 32], sizes = [40, 128], strides = [1, 1]} : vector<40x160xf32> to vector<40x128xf32>
    %95 = arith.maximumf %93, %94 : vector<40x128xf32>
    %96 = vector.extract_strided_slice %95 {offsets = [0, 0], sizes = [32, 128], strides = [1, 1]} : vector<40x128xf32> to vector<32x128xf32>
    %97 = vector.extract_strided_slice %95 {offsets = [8, 0], sizes = [32, 128], strides = [1, 1]} : vector<40x128xf32> to vector<32x128xf32>
    %98 = arith.maximumf %96, %97 : vector<32x128xf32>
    %cst_77 = arith.constant 0.000000e+00 : f32
    %99 = vector.broadcast %cst_77 : f32 to vector<8x32xf32>
    %100 = vector.extract_strided_slice %98 {offsets = [0, 0], sizes = [8, 128], strides = [1, 1]} : vector<32x128xf32> to vector<8x128xf32>
    %c0_78 = arith.constant 0 : index
    %c0_79 = arith.constant 0 : index
    %c0_80 = arith.constant 0 : index
    %101 = vector.load %arg6[%c0_78, %c0_79, %c0_80] : memref<4x128x32xf32, #tpu.memory_space<vmem>>, vector<1x128x32xf32>
    %102 = vector.shape_cast %101 : vector<1x128x32xf32> to vector<128x32xf32>
    %cst_81 = arith.constant dense<0.000000e+00> : vector<8x32xf32>
    %103 = tpu.matmul %100, %102, %cst_81 {dimension_numbers = #tpu.dot_dimension_numbers<[1], [0], [0], [1], [0, 0, 1, 1], [], []>} : vector<8x128xf32>, vector<128x32xf32>, vector<8x32xf32> -> vector<8x32xf32>
    %104 = arith.addf %99, %103 : vector<8x32xf32>
    %105 = vector.extract_strided_slice %98 {offsets = [8, 0], sizes = [8, 128], strides = [1, 1]} : vector<32x128xf32> to vector<8x128xf32>
    %c1_82 = arith.constant 1 : index
    %c0_83 = arith.constant 0 : index
    %c0_84 = arith.constant 0 : index
    %106 = vector.load %arg6[%c1_82, %c0_83, %c0_84] : memref<4x128x32xf32, #tpu.memory_space<vmem>>, vector<1x128x32xf32>
    %107 = vector.shape_cast %106 : vector<1x128x32xf32> to vector<128x32xf32>
    %cst_85 = arith.constant dense<0.000000e+00> : vector<8x32xf32>
    %108 = tpu.matmul %105, %107, %cst_85 {dimension_numbers = #tpu.dot_dimension_numbers<[1], [0], [0], [1], [0, 0, 1, 1], [], []>} : vector<8x128xf32>, vector<128x32xf32>, vector<8x32xf32> -> vector<8x32xf32>
    %109 = arith.addf %104, %108 : vector<8x32xf32>
    %110 = vector.extract_strided_slice %98 {offsets = [16, 0], sizes = [8, 128], strides = [1, 1]} : vector<32x128xf32> to vector<8x128xf32>
    %c2_86 = arith.constant 2 : index
    %c0_87 = arith.constant 0 : index
    %c0_88 = arith.constant 0 : index
    %111 = vector.load %arg6[%c2_86, %c0_87, %c0_88] : memref<4x128x32xf32, #tpu.memory_space<vmem>>, vector<1x128x32xf32>
    %112 = vector.shape_cast %111 : vector<1x128x32xf32> to vector<128x32xf32>
    %cst_89 = arith.constant dense<0.000000e+00> : vector<8x32xf32>
    %113 = tpu.matmul %110, %112, %cst_89 {dimension_numbers = #tpu.dot_dimension_numbers<[1], [0], [0], [1], [0, 0, 1, 1], [], []>} : vector<8x128xf32>, vector<128x32xf32>, vector<8x32xf32> -> vector<8x32xf32>
    %114 = arith.addf %109, %113 : vector<8x32xf32>
    %115 = vector.extract_strided_slice %98 {offsets = [24, 0], sizes = [8, 128], strides = [1, 1]} : vector<32x128xf32> to vector<8x128xf32>
    %c3_90 = arith.constant 3 : index
    %c0_91 = arith.constant 0 : index
    %c0_92 = arith.constant 0 : index
    %116 = vector.load %arg6[%c3_90, %c0_91, %c0_92] : memref<4x128x32xf32, #tpu.memory_space<vmem>>, vector<1x128x32xf32>
    %117 = vector.shape_cast %116 : vector<1x128x32xf32> to vector<128x32xf32>
    %cst_93 = arith.constant dense<0.000000e+00> : vector<8x32xf32>
    %118 = tpu.matmul %115, %117, %cst_93 {dimension_numbers = #tpu.dot_dimension_numbers<[1], [0], [0], [1], [0, 0, 1, 1], [], []>} : vector<8x128xf32>, vector<128x32xf32>, vector<8x32xf32> -> vector<8x32xf32>
    %119 = arith.addf %114, %118 : vector<8x32xf32>
    %c0_94 = arith.constant 0 : index
    %c0_95 = arith.constant 0 : index
    %120 = vector.load %arg7[%c0_94, %c0_95] : memref<1x32xf32, #tpu.memory_space<vmem>>, vector<1x32xf32>
    %121 = vector.broadcast %120 : vector<1x32xf32> to vector<8x32xf32>
    %122 = arith.addf %119, %121 : vector<8x32xf32>
    %cst_96 = arith.constant 0.000000e+00 : f32
    %123 = vector.broadcast %cst_96 : f32 to vector<8x32xf32>
    %124 = arith.maximumf %122, %123 : vector<8x32xf32>
    %c0_97 = arith.constant 0 : index
    %c0_98 = arith.constant 0 : index
    %125 = vector.load %arg8[%c0_97, %c0_98] : memref<32x128xf32, #tpu.memory_space<vmem>>, vector<32x128xf32>
    %cst_99 = arith.constant dense<0.000000e+00> : vector<8x128xf32>
    %126 = tpu.matmul %124, %125, %cst_99 {dimension_numbers = #tpu.dot_dimension_numbers<[1], [0], [0], [1], [0, 0, 1, 1], [], []>} : vector<8x32xf32>, vector<32x128xf32>, vector<8x128xf32> -> vector<8x128xf32>
    %c0_100 = arith.constant 0 : index
    %c0_101 = arith.constant 0 : index
    %127 = vector.load %arg9[%c0_100, %c0_101] : memref<1x128xf32, #tpu.memory_space<vmem>>, vector<1x128xf32>
    %128 = vector.broadcast %127 : vector<1x128xf32> to vector<8x128xf32>
    %129 = arith.addf %126, %128 : vector<8x128xf32>
    %c0_102 = arith.constant 0 : index
    %c0_103 = arith.constant 0 : index
    %130 = vector.load %arg10[%c0_102, %c0_103] : memref<8x128xf32, #tpu.memory_space<vmem>>, vector<8x128xf32>
    tpu.vector_store %arg10[%c0_102, %c0_103], %129 {strides = array<i32>} : memref<8x128xf32, #tpu.memory_space<vmem>>, vector<8x128xf32>,
    return
  }
  func.func @transform_0(%arg0: i32) -> (i32, i32, i32) {
    %c0_i32 = arith.constant 0 : i32
    %c0_i32_0 = arith.constant 0 : i32
    %c0_i32_1 = arith.constant 0 : i32
    return %arg0, %c0_i32, %c0_i32_0 : i32, i32, i32
  }
  func.func @transform_1(%arg0: i32) -> (i32, i32) {
    %c0_i32 = arith.constant 0 : i32
    %c0_i32_0 = arith.constant 0 : i32
    %c0_i32_1 = arith.constant 0 : i32
    return %c0_i32, %c0_i32_0 : i32, i32
  }
  func.func @transform_2(%arg0: i32) -> (i32, i32) {
    %c0_i32 = arith.constant 0 : i32
    %c0_i32_0 = arith.constant 0 : i32
    %c0_i32_1 = arith.constant 0 : i32
    return %c0_i32, %c0_i32_0 : i32, i32
  }
  func.func @transform_3(%arg0: i32) -> (i32, i32, i32) {
    %c0_i32 = arith.constant 0 : i32
    %c0_i32_0 = arith.constant 0 : i32
    %c0_i32_1 = arith.constant 0 : i32
    %c0_i32_2 = arith.constant 0 : i32
    return %c0_i32, %c0_i32_0, %c0_i32_1 : i32, i32, i32
  }
  func.func @transform_4(%arg0: i32) -> (i32, i32) {
    %c0_i32 = arith.constant 0 : i32
    %c0_i32_0 = arith.constant 0 : i32
    %c0_i32_1 = arith.constant 0 : i32
    return %c0_i32, %c0_i32_0 : i32, i32
  }
  func.func @transform_5(%arg0: i32) -> (i32, i32, i32) {
    %c0_i32 = arith.constant 0 : i32
    %c0_i32_0 = arith.constant 0 : i32
    %c0_i32_1 = arith.constant 0 : i32
    %c0_i32_2 = arith.constant 0 : i32
    return %c0_i32, %c0_i32_0, %c0_i32_1 : i32, i32, i32
  }
  func.func @transform_6(%arg0: i32) -> (i32, i32) {
    %c0_i32 = arith.constant 0 : i32
    %c0_i32_0 = arith.constant 0 : i32
    %c0_i32_1 = arith.constant 0 : i32
    return %c0_i32, %c0_i32_0 : i32, i32
  }
  func.func @transform_7(%arg0: i32) -> (i32, i32) {
    %c0_i32 = arith.constant 0 : i32
    %c0_i32_0 = arith.constant 0 : i32
    %c0_i32_1 = arith.constant 0 : i32
    return %c0_i32, %c0_i32_0 : i32, i32
  }
  func.func @transform_8(%arg0: i32) -> (i32, i32) {
    %c0_i32 = arith.constant 0 : i32
    %c0_i32_0 = arith.constant 0 : i32
    %c0_i32_1 = arith.constant 0 : i32
    return %c0_i32, %c0_i32_0 : i32, i32
  }
  func.func @transform_9(%arg0: i32) -> (i32, i32) {
    %c0_i32 = arith.constant 0 : i32
    %c0_i32_0 = arith.constant 0 : i32
    return %arg0, %c0_i32 : i32, i32
  }
}

</mosaic_0001>

<llo_original>
// kernel: cnn_forward.1
$region0: #{cnn_forward.1}
  #allocation0 [shape = 'u32[]', space=smem, size = 0x4, offset = 0x4, fixed_abs, tag = 'smem constant byte address 0x4 - core index']
  #allocation1 [shape = 'u32[72,128]{1,0:T(1,128)}', space=vmem, size = 0x9000, scoped, tag = 'internal scratch']
  #allocation2 [shape = 'f32[104,208]{1,0:T(8,128)}', space=vmem, size = 0x1a000, scoped, tag = 'scratch operand']
  #allocation3 [shape = 'f32[4,48,96]{2,1,0:T(8,128)}', space=vmem, size = 0x18000, scoped, tag = 'scratch operand']
  %s0 = inlined_call_operand.vmem [shape: bf16[2,104,256], index: 0, kind: input, shape index: {}]
  %s1 = inlined_call_operand.vmem [shape: bf16[256,208], index: 1, kind: input, shape index: {}]
  %s2 = inlined_call_operand.vmem [shape: f32[1,208], index: 2, kind: input, shape index: {}]
  %s3 = inlined_call_operand.vmem [shape: f32[8,96,160], index: 3, kind: input, shape index: {}]
  %s4 = inlined_call_operand.vmem [shape: f32[1,160], index: 4, kind: input, shape index: {}]
  %s5 = inlined_call_operand.vmem [shape: f32[4,128,32], index: 5, kind: input, shape index: {}]
  %s6 = inlined_call_operand.vmem [shape: f32[1,32], index: 6, kind: input, shape index: {}]
  %s7 = inlined_call_operand.vmem [shape: f32[32,128], index: 7, kind: input, shape index: {}]
  %s8 = inlined_call_operand.vmem [shape: f32[1,128], index: 8, kind: input, shape index: {}]
  %s9 = inlined_call_operand.hbm [shape: f32[16,128], index: 9, kind: output, shape index: {}]
  %s10 = sld [smem:[#allocation0]]
  $region69: #{cnn_forward.1} parent=0
    _
  %s12 = ssub.s32 1, %s10
  %s13 = scalar_select 0, %s12, %s10
  $region1: #{cnn_forward.1} parent=0
    #allocation4 [shape = 'u8[8192]{0}', space=vmem, size = 0x2000, scoped, tag = 'output window, operand 0']
    #allocation5 [shape = 's32[2]{0}', space=sflag, size = 0x8, scoped, tag = 'scoped memory for cnn_forward.1']
    %14 = vsyncpa [#allocation5], 0
    %s15 = scalar_lea.sflag [#allocation5], 1
    %16 = vsyncpa %s15, 0
    loop: start=0, step=1, limit=4
    $region2: #{cnn_forward.1} parent=1 // loop_pre_header
      _
    $region3: #{cnn_forward.1} parent=1 // loop_header
      %s18 = sphi 0, %s22
      %p19 = scmp.ge.s32.totalorder %s18, 4
      %s28 = sphi 0, %s30
      %s31 = sphi 0, %s28
      %s32 = sphi 0, %s31
      %s48 = sphi 0, %s32
      %s52 = sphi 0, %s52
      %s54 = sphi 0, %s52
      %s55 = sphi 0, %s54
      %s69 = sphi 0, %s55
      %s73 = sphi 0, %s73
      %s75 = sphi 0, %s73
      %s76 = sphi 0, %s75
      %s90 = sphi 0, %s76
      %s94 = sphi 0, %s94
      %s96 = sphi 0, %s94
      %s97 = sphi 0, %s96
      %s111 = sphi 0, %s97
      %s115 = sphi 0, %s115
      %s117 = sphi 0, %s115
      %s118 = sphi 0, %s117
      %s132 = sphi 0, %s118
      %s136 = sphi 0, %s136
      %s138 = sphi 0, %s136
      %s139 = sphi 0, %s138
      %s153 = sphi 0, %s139
      %s157 = sphi 0, %s157
      %s159 = sphi 0, %s157
      %s160 = sphi 0, %s159
      %s174 = sphi 0, %s160
      %s178 = sphi 0, %s178
      %s180 = sphi 0, %s178
      %s181 = sphi 0, %s180
      %s195 = sphi 0, %s181
      %s199 = sphi 0, %s199
      %s201 = sphi 0, %s199
      %s202 = sphi 0, %s201
      %s216 = sphi 0, %s202
      %s222 = sphi 0, %s224
      %s225 = sphi 0, %s222
      %s226 = sphi 0, %s225
      %s242 = sphi 0, %s226
    $region4: #{cnn_forward.1} parent=1 // loop_header_branch
      %21 = sbr.rel (%p19) target = $region8
    $region5: #{cnn_forward.1} parent=1 // loop_body
      %s23 = ssub.s32 %s18, 1
      %s24 = ssub.s32 %s18, 2
      %s25 = sadd.s32 %s18, 1
      %s26 = ssub.s32 %s18, %s25
      %p27 = scmp.eq.s32.totalorder %s26, 0
      %s29 = sadd.s32 %s28, 1
      %s30 = scalar_select %p27, %s28, %s29
      %p33 = pneg %p27
      %p34 = scmp.eq.s32.totalorder %s18, 1
      %p35 = por %p33, %p34
      %p36 = scmp.ne.s32.totalorder %s28, %s31
      %p37 = scmp.eq.s32.totalorder %s18, 0
      %p38 = por %p36, %p37
      %p39 = scmp.ne.s32.totalorder %s28, %s31
      %p40 = scmp.eq.s32.totalorder %s23, 1
      %p41 = por %p39, %p40
      %p42 = scmp.ne.s32.totalorder %s31, %s32
      %p43 = scmp.eq.s32.totalorder %s23, 0
      %p44 = por %p42, %p43
      %p45 = scmp.ne.s32.totalorder %s31, %s32
      %p46 = scmp.eq.s32.totalorder %s24, 1
      %p47 = por %p45, %p46
      %p49 = scmp.ne.s32.totalorder %s32, %s48
      %p50 = scmp.eq.s32.totalorder %s24, 0
      %p51 = por %p49, %p50
      %s53 = sadd.s32 %s52, 1
      %p56 = scmp.eq.s32.totalorder %s18, 1
      %p57 = scmp.ne.s32.totalorder %s52, %s54
      %p58 = scmp.eq.s32.totalorder %s18, 0
      %p59 = por %p57, %p58
      %p60 = scmp.ne.s32.totalorder %s52, %s54
      %p61 = scmp.eq.s32.totalorder %s23, 1
      %p62 = por %p60, %p61
      %p63 = scmp.ne.s32.totalorder %s54, %s55
      %p64 = scmp.eq.s32.totalorder %s23, 0
      %p65 = por %p63, %p64
      %p66 = scmp.ne.s32.totalorder %s54, %s55
      %p67 = scmp.eq.s32.totalorder %s24, 1
      %p68 = por %p66, %p67
      %p70 = scmp.ne.s32.totalorder %s55, %s69
      %p71 = scmp.eq.s32.totalorder %s24, 0
      %p72 = por %p70, %p71
      %s74 = sadd.s32 %s73, 1
      %p77 = scmp.eq.s32.totalorder %s18, 1
      %p78 = scmp.ne.s32.totalorder %s73, %s75
      %p79 = scmp.eq.s32.totalorder %s18, 0
      %p80 = por %p78, %p79
      %p81 = scmp.ne.s32.totalorder %s73, %s75
      %p82 = scmp.eq.s32.totalorder %s23, 1
      %p83 = por %p81, %p82
      %p84 = scmp.ne.s32.totalorder %s75, %s76
      %p85 = scmp.eq.s32.totalorder %s23, 0
      %p86 = por %p84, %p85
      %p87 = scmp.ne.s32.totalorder %s75, %s76
      %p88 = scmp.eq.s32.totalorder %s24, 1
      %p89 = por %p87, %p88
      %p91 = scmp.ne.s32.totalorder %s76, %s90
      %p92 = scmp.eq.s32.totalorder %s24, 0
      %p93 = por %p91, %p92
      %s95 = sadd.s32 %s94, 1
      %p98 = scmp.eq.s32.totalorder %s18, 1
      %p99 = scmp.ne.s32.totalorder %s94, %s96
      %p100 = scmp.eq.s32.totalorder %s18, 0
      %p101 = por %p99, %p100
      %p102 = scmp.ne.s32.totalorder %s94, %s96
      %p103 = scmp.eq.s32.totalorder %s23, 1
      %p104 = por %p102, %p103
      %p105 = scmp.ne.s32.totalorder %s96, %s97
      %p106 = scmp.eq.s32.totalorder %s23, 0
      %p107 = por %p105, %p106
      %p108 = scmp.ne.s32.totalorder %s96, %s97
      %p109 = scmp.eq.s32.totalorder %s24, 1
      %p110 = por %p108, %p109
      %p112 = scmp.ne.s32.totalorder %s97, %s111
      %p113 = scmp.eq.s32.totalorder %s24, 0
      %p114 = por %p112, %p113
      %s116 = sadd.s32 %s115, 1
      %p119 = scmp.eq.s32.totalorder %s18, 1
      %p120 = scmp.ne.s32.totalorder %s115, %s117
      %p121 = scmp.eq.s32.totalorder %s18, 0
      %p122 = por %p120, %p121
      %p123 = scmp.ne.s32.totalorder %s115, %s117
      %p124 = scmp.eq.s32.totalorder %s23, 1
      %p125 = por %p123, %p124
      %p126 = scmp.ne.s32.totalorder %s117, %s118
      %p127 = scmp.eq.s32.totalorder %s23, 0
      %p128 = por %p126, %p127
      %p129 = scmp.ne.s32.totalorder %s117, %s118
      %p130 = scmp.eq.s32.totalorder %s24, 1
      %p131 = por %p129, %p130
      %p133 = scmp.ne.s32.totalorder %s118, %s132
      %p134 = scmp.eq.s32.totalorder %s24, 0
      %p135 = por %p133, %p134
      %s137 = sadd.s32 %s136, 1
      %p140 = scmp.eq.s32.totalorder %s18, 1
      %p141 = scmp.ne.s32.totalorder %s136, %s138
      %p142 = scmp.eq.s32.totalorder %s18, 0
      %p143 = por %p141, %p142
      %p144 = scmp.ne.s32.totalorder %s136, %s138
      %p145 = scmp.eq.s32.totalorder %s23, 1
      %p146 = por %p144, %p145
      %p147 = scmp.ne.s32.totalorder %s138, %s139
      %p148 = scmp.eq.s32.totalorder %s23, 0
      %p149 = por %p147, %p148
      %p150 = scmp.ne.s32.totalorder %s138, %s139
      %p151 = scmp.eq.s32.totalorder %s24, 1
      %p152 = por %p150, %p151
      %p154 = scmp.ne.s32.totalorder %s139, %s153
      %p155 = scmp.eq.s32.totalorder %s24, 0
      %p156 = por %p154, %p155
      %s158 = sadd.s32 %s157, 1
      %p161 = scmp.eq.s32.totalorder %s18, 1
      %p162 = scmp.ne.s32.totalorder %s157, %s159
      %p163 = scmp.eq.s32.totalorder %s18, 0
      %p164 = por %p162, %p163
      %p165 = scmp.ne.s32.totalorder %s157, %s159
      %p166 = scmp.eq.s32.totalorder %s23, 1
      %p167 = por %p165, %p166
      %p168 = scmp.ne.s32.totalorder %s159, %s160
      %p169 = scmp.eq.s32.totalorder %s23, 0
      %p170 = por %p168, %p169
      %p171 = scmp.ne.s32.totalorder %s159, %s160
      %p172 = scmp.eq.s32.totalorder %s24, 1
      %p173 = por %p171, %p172
      %p175 = scmp.ne.s32.totalorder %s160, %s174
      %p176 = scmp.eq.s32.totalorder %s24, 0
      %p177 = por %p175, %p176
      %s179 = sadd.s32 %s178, 1
      %p182 = scmp.eq.s32.totalorder %s18, 1
      %p183 = scmp.ne.s32.totalorder %s178, %s180
      %p184 = scmp.eq.s32.totalorder %s18, 0
      %p185 = por %p183, %p184
      %p186 = scmp.ne.s32.totalorder %s178, %s180
      %p187 = scmp.eq.s32.totalorder %s23, 1
      %p188 = por %p186, %p187
      %p189 = scmp.ne.s32.totalorder %s180, %s181
      %p190 = scmp.eq.s32.totalorder %s23, 0
      %p191 = por %p189, %p190
      %p192 = scmp.ne.s32.totalorder %s180, %s181
      %p193 = scmp.eq.s32.totalorder %s24, 1
      %p194 = por %p192, %p193
      %p196 = scmp.ne.s32.totalorder %s181, %s195
      %p197 = scmp.eq.s32.totalorder %s24, 0
      %p198 = por %p196, %p197
      %s200 = sadd.s32 %s199, 1
      %p203 = scmp.eq.s32.totalorder %s18, 1
      %p204 = scmp.ne.s32.totalorder %s199, %s201
      %p205 = scmp.eq.s32.totalorder %s18, 0
      %p206 = por %p204, %p205
      %p207 = scmp.ne.s32.totalorder %s199, %s201
      %p208 = scmp.eq.s32.totalorder %s23, 1
      %p209 = por %p207, %p208
      %p210 = scmp.ne.s32.totalorder %s201, %s202
      %p211 = scmp.eq.s32.totalorder %s23, 0
      %p212 = por %p210, %p211
      %p213 = scmp.ne.s32.totalorder %s201, %s202
      %p214 = scmp.eq.s32.totalorder %s24, 1
      %p215 = por %p213, %p214
      %p217 = scmp.ne.s32.totalorder %s202, %s216
      %p218 = scmp.eq.s32.totalorder %s24, 0
      %p219 = por %p217, %p218
      %s220 = ssub.s32 %s18, %s25
      %p221 = scmp.eq.s32.totalorder %s220, 0
      %s223 = sadd.s32 %s222, 1
      %s224 = scalar_select %p221, %s222, %s223
      %p227 = pneg %p221
      %p228 = scmp.eq.s32.totalorder %s18, 1
      %p229 = por %p227, %p228
      %p230 = scmp.ne.s32.totalorder %s222, %s225
      %p231 = scmp.eq.s32.totalorder %s18, 0
      %p232 = por %p230, %p231
      %p233 = scmp.ne.s32.totalorder %s222, %s225
      %p234 = scmp.eq.s32.totalorder %s23, 1
      %p235 = por %p233, %p234
      %p236 = scmp.ne.s32.totalorder %s225, %s226
      %p237 = scmp.eq.s32.totalorder %s23, 0
      %p238 = por %p236, %p237
      %p239 = scmp.ne.s32.totalorder %s225, %s226
      %p240 = scmp.eq.s32.totalorder %s24, 1
      %p241 = por %p239, %p240
      %p243 = scmp.ne.s32.totalorder %s226, %s242
      %p244 = scmp.eq.s32.totalorder %s24, 0
      %p245 = por %p243, %p244
      %p246 = scmp.le.s32.totalorder 1, %s18
      %p247 = scmp.lt.s32.totalorder %s18, 3
      %p248 = pnand %p246, %p247
      %p249 = pneg %p248
      // Predicated region
      $region9: #{cnn_forward.1} parent=5 // pred_check
        _
      $region10: #{cnn_forward.1} parent=5 // pred_check_branch
        %251 = sbr.rel (%p248) target = $region12
      $region11: #{cnn_forward.1} parent=5 // pred_region
        %s252 = ssub.s32 %s18, 1
        // Predicated region
        $region13: #{cnn_forward.1} parent=11 // pred_check
          %p253 = pneg %p65
        $region14: #{cnn_forward.1} parent=11 // pred_check_branch
          %255 = sbr.rel (%p253) target = $region16
        $region15: #{cnn_forward.1} parent=11 // pred_region
          _
        $region16: #{cnn_forward.1} parent=11 // pred_fallthru
          _
        // Predicated region
        $region17: #{cnn_forward.1} parent=11 // pred_check
          %p256 = pneg %p86
        $region18: #{cnn_forward.1} parent=11 // pred_check_branch
          %258 = sbr.rel (%p256) target = $region20
        $region19: #{cnn_forward.1} parent=11 // pred_region
          _
        $region20: #{cnn_forward.1} parent=11 // pred_fallthru
          _
        // Predicated region
        $region21: #{cnn_forward.1} parent=11 // pred_check
          %p259 = pneg %p107
        $region22: #{cnn_forward.1} parent=11 // pred_check_branch
          %261 = sbr.rel (%p259) target = $region24
        $region23: #{cnn_forward.1} parent=11 // pred_region
          _
        $region24: #{cnn_forward.1} parent=11 // pred_fallthru
          _
        // Predicated region
        $region25: #{cnn_forward.1} parent=11 // pred_check
          %p262 = pneg %p128
        $region26: #{cnn_forward.1} parent=11 // pred_check_branch
          %264 = sbr.rel (%p262) target = $region28
        $region27: #{cnn_forward.1} parent=11 // pred_region
          _
        $region28: #{cnn_forward.1} parent=11 // pred_fallthru
          _
        // Predicated region
        $region29: #{cnn_forward.1} parent=11 // pred_check
          %p265 = pneg %p149
        $region30: #{cnn_forward.1} parent=11 // pred_check_branch
          %267 = sbr.rel (%p265) target = $region32
        $region31: #{cnn_forward.1} parent=11 // pred_region
          _
        $region32: #{cnn_forward.1} parent=11 // pred_fallthru
          _
        // Predicated region
        $region33: #{cnn_forward.1} parent=11 // pred_check
          %p268 = pneg %p170
        $region34: #{cnn_forward.1} parent=11 // pred_check_branch
          %270 = sbr.rel (%p268) target = $region36
        $region35: #{cnn_forward.1} parent=11 // pred_region
          _
        $region36: #{cnn_forward.1} parent=11 // pred_fallthru
          _
        // Predicated region
        $region37: #{cnn_forward.1} parent=11 // pred_check
          %p271 = pneg %p191
        $region38: #{cnn_forward.1} parent=11 // pred_check_branch
          %273 = sbr.rel (%p271) target = $region40
        $region39: #{cnn_forward.1} parent=11 // pred_region
          _
        $region40: #{cnn_forward.1} parent=11 // pred_fallthru
          _
        // Predicated region
        $region41: #{cnn_forward.1} parent=11 // pred_check
          %p274 = pneg %p212
        $region42: #{cnn_forward.1} parent=11 // pred_check_branch
          %276 = sbr.rel (%p274) target = $region44
        $region43: #{cnn_forward.1} parent=11 // pred_region
          _
        $region44: #{cnn_forward.1} parent=11 // pred_fallthru
          _
      $region12: #{cnn_forward.1} parent=5 // pred_fallthru
        _
      %p277 = scmp.lt.s32.totalorder %s18, 2
      // Predicated region
      $region45: #{cnn_forward.1} parent=5 // pred_check
        %p278 = pneg %p277
      $region46: #{cnn_forward.1} parent=5 // pred_check_branch
        %280 = sbr.rel (%p278) target = $region48
      $region47: #{cnn_forward.1} parent=5 // pred_region
        // Predicated region
        $region49: #{cnn_forward.1} parent=47 // pred_check
          %p281 = pneg %p38
        $region50: #{cnn_forward.1} parent=47 // pred_check_branch
          %283 = sbr.rel (%p281) target = $region52
        $region51: #{cnn_forward.1} parent=47 // pred_region
          %p284 = scmp.lt.s32.totalorder %s18, 1
          %s285 = scalar_select %p284, %s18, 1
          %s286 = smul.addr %s285, 26
          %s287 = smul.addr %s286, 4
          %s288 = scalar_lea.vmem %s0, %s287
        $region52: #{cnn_forward.1} parent=47 // pred_fallthru
          _
      $region48: #{cnn_forward.1} parent=5 // pred_fallthru
        _
      %p289 = scmp.le.s32.totalorder 1, %s18
      %p290 = scmp.lt.s32.totalorder %s18, 3
      %p291 = pnand %p289, %p290
      %p292 = pneg %p291
      // Predicated region
      $region53: #{cnn_forward.1} parent=5 // pred_check
        _
      $region54: #{cnn_forward.1} parent=5 // pred_check_branch
        %294 = sbr.rel (%p291) target = $region56
      $region55: #{cnn_forward.1} parent=5 // pred_region
        %s295 = ssub.s32 %s18, 1
        %p296 = scmp.lt.s32.totalorder %s23, 1
        %s297 = scalar_select %p296, %s23, 1
        %s298 = smul.addr %s297, 26
        %s299 = smul.addr %s298, 4
        %s300 = scalar_lea.vmem %s0, %s299
        %p301 = pneg %p44
        %p302 = pneg %p41
        %p303 = pneg %p65
        %p304 = pneg %p62
        %p305 = pneg %p86
        %p306 = pneg %p83
        %p307 = pneg %p107
        %p308 = pneg %p104
        %p309 = pneg %p128
        %p310 = pneg %p125
        %p311 = pneg %p149
        %p312 = pneg %p146
        %p313 = pneg %p170
        %p314 = pneg %p167
        %p315 = pneg %p191
        %p316 = pneg %p188
        %p317 = pneg %p212
        %p318 = pneg %p209
        %p319 = pneg %p238
        %p320 = pneg %p235
        %s321 = sand.u32 %s225, 1
        %s322 = scalar_lea.sflag [#allocation5], %s321
        %s323 = sand.u32 %s225, 1
        %s324 = smul.addr %s323, 8
        %s325 = scalar_lea.vmem [#allocation4], %s324
        %p326 = scmp.lt.s32.totalorder %s23, 1
        %s327 = scalar_select %p326, %s23, 1
        %s328 = smul.addr %s327, 26
        %s329 = smul.addr %s328, 4
        %s330 = scalar_lea.vmem %s0, %s329
        %v331 = vld [vmem:[%s330] sm:$0xff]
        %v332 = vld [vmem:[%s330 + $0x8] sm:$0xff]
        %v333 = vld [vmem:[%s330 + $0x10] sm:$0xff]
        %v334 = vld [vmem:[%s330 + $0x18] sm:$0xff]
        %v335 = vld [vmem:[%s330 + $0x20] sm:$0xff]
        %v336 = vld [vmem:[%s330 + $0x28] sm:$0xff]
        %v337 = vld [vmem:[%s330 + $0x30] sm:$0xff]
        %v338 = vld [vmem:[%s330 + $0x38] sm:$0xff]
        %v339 = vld [vmem:[%s330 + $0x40] sm:$0xff]
        %v340 = vld [vmem:[%s330 + $0x48] sm:$0xff]
        %v341 = vld [vmem:[%s330 + $0x50] sm:$0xff]
        %v342 = vld [vmem:[%s330 + $0x58] sm:$0xff]
        %v343 = vld [vmem:[%s330 + $0x60] sm:$0xff]
        %v344 = vld [vmem:[%s1] sm:$0xff]
        %v345 = vld [vmem:[%s1 + $0x8] sm:$0xff]
        %v346 = vld [vmem:[%s1 + $0x10] sm:$0xff]
        %v347 = vld [vmem:[%s1 + $0x18] sm:$0xff]
        %v348 = vld [vmem:[%s1 + $0x20] sm:$0xff]
        %v349 = vld [vmem:[%s1 + $0x28] sm:$0xff]
        %v350 = vld [vmem:[%s1 + $0x30] sm:$0xff]
        %v351 = vld [vmem:[%s1 + $0x38] sm:$0xff]
        %v352 = vld [vmem:[%s1 + $0x40] sm:$0xff]
        %v353 = vld [vmem:[%s1 + $0x48] sm:$0xff]
        %v354 = vld [vmem:[%s1 + $0x50] sm:$0xff]
        %v355 = vld [vmem:[%s1 + $0x58] sm:$0xff]
        %v356 = vld [vmem:[%s1 + $0x60] sm:$0xff]
        %v357 = vld [vmem:[%s1 + $0x68] sm:$0xff]
        %v358 = vld [vmem:[%s1 + $0x70] sm:$0xff]
        %v359 = vld [vmem:[%s1 + $0x78] sm:$0xff]
        %v360 = vld [vmem:[%s1 + $0x80] sm:$0xff]
        %v361 = vld [vmem:[%s1 + $0x88] sm:$0xff]
        %v362 = vld [vmem:[%s1 + $0x90] sm:$0xff]
        %v363 = vld [vmem:[%s1 + $0x98] sm:$0xff]
        %v364 = vld [vmem:[%s1 + $0xa0] sm:$0xff]
        %v365 = vld [vmem:[%s1 + $0xa8] sm:$0xff]
        %v366 = vld [vmem:[%s1 + $0xb0] sm:$0xff]
        %v367 = vld [vmem:[%s1 + $0xb8] sm:$0xff]
        %v368 = vld [vmem:[%s1 + $0xc0] sm:$0xff]
        %v369 = vld [vmem:[%s1 + $0xc8] sm:$0xff]
        %v370 = vld [vmem:[%s1 + $0xd0] sm:$0xff]
        %v371 = vld [vmem:[%s1 + $0xd8] sm:$0xff]
        %v372 = vld [vmem:[%s1 + $0xe0] sm:$0xff]
        %v373 = vld [vmem:[%s1 + $0xe8] sm:$0xff]
        %v374 = vld [vmem:[%s1 + $0xf0] sm:$0xff]
        %v375 = vld [vmem:[%s1 + $0xf8] sm:$0xff]
        %v376 = vld [vmem:[%s2] sm:$0x3]
        %v378 = vperm.slane %v376, 0
        %v379 = vperm.slane %v376, 1
        %v395 = vunpack.c.l.b16 %v331
        %v396 = vunpack.c.h.b16 %v331
        %v397 = vunpack.c.l.b16 %v332
        %v398 = vunpack.c.h.b16 %v332
        %v399 = vunpack.c.l.b16 %v333
        %v400 = vunpack.c.h.b16 %v333
        %v401 = vunpack.c.l.b16 %v334
        %v402 = vunpack.c.h.b16 %v334
        %v403 = vunpack.c.l.b16 %v335
        %v404 = vunpack.c.h.b16 %v335
        %v405 = vunpack.c.l.b16 %v336
        %v406 = vunpack.c.h.b16 %v336
        %v407 = vunpack.c.l.b16 %v337
        %v408 = vunpack.c.h.b16 %v337
        %v409 = vunpack.c.l.b16 %v338
        %v410 = vunpack.c.h.b16 %v338
        %v411 = vunpack.c.l.b16 %v339
        %v412 = vunpack.c.h.b16 %v339
        %v413 = vunpack.c.l.b16 %v340
        %v414 = vunpack.c.h.b16 %v340
        %v415 = vunpack.c.l.b16 %v341
        %v416 = vunpack.c.h.b16 %v341
        %v417 = vunpack.c.l.b16 %v342
        %v418 = vunpack.c.h.b16 %v342
        %v419 = vunpack.c.l.b16 %v343
        %v420 = vunpack.c.h.b16 %v343
        %v421 = vpack.c.b16 %v397, %v395
        %v422 = vpack.c.b16 %v398, %v396
        %v423 = vpack.c.b16 %v401, %v399
        %v424 = vpack.c.b16 %v402, %v400
        %v425 = vpack.c.b16 %v405, %v403
        %v426 = vpack.c.b16 %v406, %v404
        %v427 = vpack.c.b16 %v409, %v407
        %v428 = vpack.c.b16 %v410, %v408
        %v429 = vpack.c.b16 %v413, %v411
        %v430 = vpack.c.b16 %v414, %v412
        %v431 = vpack.c.b16 %v417, %v415
        %v432 = vpack.c.b16 %v418, %v416
        %v433 = vpack.c.b16 %v419, %v419
        %v434 = vpack.c.b16 %v420, %v420
        %v481 = vunpack.c.l.b16 %v344
        %v482 = vunpack.c.h.b16 %v344
        %v483 = vunpack.c.l.b16 %v345
        %v484 = vunpack.c.h.b16 %v345
        %v485 = vunpack.c.l.b16 %v346
        %v486 = vunpack.c.h.b16 %v346
        %v487 = vunpack.c.l.b16 %v347
        %v488 = vunpack.c.h.b16 %v347
        %v489 = vunpack.c.l.b16 %v348
        %v490 = vunpack.c.h.b16 %v348
        %v491 = vunpack.c.l.b16 %v349
        %v492 = vunpack.c.h.b16 %v349
        %v493 = vunpack.c.l.b16 %v350
        %v494 = vunpack.c.h.b16 %v350
        %v495 = vunpack.c.l.b16 %v351
        %v496 = vunpack.c.h.b16 %v351
        %v497 = vunpack.c.l.b16 %v352
        %v498 = vunpack.c.h.b16 %v352
        %v499 = vunpack.c.l.b16 %v353
        %v500 = vunpack.c.h.b16 %v353
        %v501 = vunpack.c.l.b16 %v354
        %v502 = vunpack.c.h.b16 %v354
        %v503 = vunpack.c.l.b16 %v355
        %v504 = vunpack.c.h.b16 %v355
        %v505 = vunpack.c.l.b16 %v356
        %v506 = vunpack.c.h.b16 %v356
        %v507 = vunpack.c.l.b16 %v357
        %v508 = vunpack.c.h.b16 %v357
        %v509 = vunpack.c.l.b16 %v358
        %v510 = vunpack.c.h.b16 %v358
        %v511 = vunpack.c.l.b16 %v359
        %v512 = vunpack.c.h.b16 %v359
        %v513 = vunpack.c.l.b16 %v360
        %v514 = vunpack.c.h.b16 %v360
        %v515 = vunpack.c.l.b16 %v361
        %v516 = vunpack.c.h.b16 %v361
        %v517 = vunpack.c.l.b16 %v362
        %v518 = vunpack.c.h.b16 %v362
        %v519 = vunpack.c.l.b16 %v363
        %v520 = vunpack.c.h.b16 %v363
        %v521 = vunpack.c.l.b16 %v364
        %v522 = vunpack.c.h.b16 %v364
        %v523 = vunpack.c.l.b16 %v365
        %v524 = vunpack.c.h.b16 %v365
        %v525 = vunpack.c.l.b16 %v366
        %v526 = vunpack.c.h.b16 %v366
        %v527 = vunpack.c.l.b16 %v367
        %v528 = vunpack.c.h.b16 %v367
        %v529 = vunpack.c.l.b16 %v368
        %v530 = vunpack.c.h.b16 %v368
        %v531 = vunpack.c.l.b16 %v369
        %v532 = vunpack.c.h.b16 %v369
        %v533 = vunpack.c.l.b16 %v370
        %v534 = vunpack.c.h.b16 %v370
        %v535 = vunpack.c.l.b16 %v371
        %v536 = vunpack.c.h.b16 %v371
        %v537 = vunpack.c.l.b16 %v372
        %v538 = vunpack.c.h.b16 %v372
        %v539 = vunpack.c.l.b16 %v373
        %v540 = vunpack.c.h.b16 %v373
        %v541 = vunpack.c.l.b16 %v374
        %v542 = vunpack.c.h.b16 %v374
        %v543 = vunpack.c.l.b16 %v375
        %v544 = vunpack.c.h.b16 %v375
        %v545 = vpack.c.b16 %v483, %v481
        %v546 = vpack.c.b16 %v484, %v482
        %v547 = vpack.c.b16 %v487, %v485
        %v548 = vpack.c.b16 %v488, %v486
        %v549 = vpack.c.b16 %v491, %v489
        %v550 = vpack.c.b16 %v492, %v490
        %v551 = vpack.c.b16 %v495, %v493
        %v552 = vpack.c.b16 %v496, %v494
        %v553 = vpack.c.b16 %v499, %v497
        %v554 = vpack.c.b16 %v500, %v498
        %v555 = vpack.c.b16 %v503, %v501
        %v556 = vpack.c.b16 %v504, %v502
        %v557 = vpack.c.b16 %v507, %v505
        %v558 = vpack.c.b16 %v508, %v506
        %v559 = vpack.c.b16 %v511, %v509
        %v560 = vpack.c.b16 %v512, %v510
        %v561 = vpack.c.b16 %v515, %v513
        %v562 = vpack.c.b16 %v516, %v514
        %v563 = vpack.c.b16 %v519, %v517
        %v564 = vpack.c.b16 %v520, %v518
        %v565 = vpack.c.b16 %v523, %v521
        %v566 = vpack.c.b16 %v524, %v522
        %v567 = vpack.c.b16 %v527, %v525
        %v568 = vpack.c.b16 %v528, %v526
        %v569 = vpack.c.b16 %v531, %v529
        %v570 = vpack.c.b16 %v532, %v530
        %v571 = vpack.c.b16 %v535, %v533
        %v572 = vpack.c.b16 %v536, %v534
        %v573 = vpack.c.b16 %v539, %v537
        %v574 = vpack.c.b16 %v540, %v538
        %v575 = vpack.c.b16 %v543, %v541
        %v576 = vpack.c.b16 %v544, %v542
        %609 = vmatpush.bf16.msra.mxu0 %v559
        %610 = vmatpush.bf16.msra.mxu0 %v557
        %611 = vmatpush.bf16.msra.mxu0 %v555
        %612 = vmatpush.bf16.msra.mxu0 %v553
        %613 = vmatpush.bf16.msra.mxu0 %v551
        %614 = vmatpush.bf16.msra.mxu0 %v549
        %615 = vmatpush.bf16.msra.mxu0 %v547
        %616 = vmatpush.bf16.msra.mxu0 %v545
        %617 = vmatmul.bf16.gmra.mxu0 %v421
        %v618 = vpop.f32.mrf.mxu0
        %v619 = vadd.f32 %v378, %v618
        %v620 = vpop.f32.mrf.mxu0
        %v621 = vadd.f32 %v378, %v620
        %622 = vmatmul.bf16.gmra.mxu0 %v423
        %v623 = vpop.f32.mrf.mxu0
        %v624 = vadd.f32 %v378, %v623
        %v625 = vpop.f32.mrf.mxu0
        %v626 = vadd.f32 %v378, %v625
        %627 = vmatmul.bf16.gmra.mxu0 %v425
        %v628 = vpop.f32.mrf.mxu0
        %v629 = vadd.f32 %v378, %v628
        %v630 = vpop.f32.mrf.mxu0
        %v631 = vadd.f32 %v378, %v630
        %632 = vmatmul.bf16.gmra.mxu0 %v427
        %v633 = vpop.f32.mrf.mxu0
        %v634 = vadd.f32 %v378, %v633
        %v635 = vpop.f32.mrf.mxu0
        %v636 = vadd.f32 %v378, %v635
        %637 = vmatmul.bf16.gmra.mxu0 %v429
        %v638 = vpop.f32.mrf.mxu0
        %v639 = vadd.f32 %v378, %v638
        %v640 = vpop.f32.mrf.mxu0
        %v641 = vadd.f32 %v378, %v640
        %642 = vmatmul.bf16.gmra.mxu0 %v431
        %v643 = vpop.f32.mrf.mxu0
        %v644 = vadd.f32 %v378, %v643
        %v645 = vpop.f32.mrf.mxu0
        %v646 = vadd.f32 %v378, %v645
        %647 = vmatmul.bf16.gmra.mxu0 %v433
        %v648 = vpop.f32.mrf.mxu0
        %v649 = vadd.f32 %v378, %v648
        %v650 = vpop.f32.mrf.mxu0
        %651 = vdwg.mxu0
        %652 = vmatpush.bf16.msra.mxu0 %v575
        %653 = vmatpush.bf16.msra.mxu0 %v573
        %654 = vmatpush.bf16.msra.mxu0 %v571
        %655 = vmatpush.bf16.msra.mxu0 %v569
        %656 = vmatpush.bf16.msra.mxu0 %v567
        %657 = vmatpush.bf16.msra.mxu0 %v565
        %658 = vmatpush.bf16.msra.mxu0 %v563
        %659 = vmatpush.bf16.msra.mxu0 %v561
        %660 = vmatmul.bf16.gmra.mxu0 %v422
        %v661 = vpop.f32.mrf.mxu0
        %v662 = vadd.f32 %v619, %v661
        %v663 = vpop.f32.mrf.mxu0
        %v664 = vadd.f32 %v621, %v663
        %665 = vmatmul.bf16.gmra.mxu0 %v424
        %v666 = vpop.f32.mrf.mxu0
        %v667 = vadd.f32 %v624, %v666
        %v668 = vpop.f32.mrf.mxu0
        %v669 = vadd.f32 %v626, %v668
        %670 = vmatmul.bf16.gmra.mxu0 %v426
        %v671 = vpop.f32.mrf.mxu0
        %v672 = vadd.f32 %v629, %v671
        %v673 = vpop.f32.mrf.mxu0
        %v674 = vadd.f32 %v631, %v673
        %675 = vmatmul.bf16.gmra.mxu0 %v428
        %v676 = vpop.f32.mrf.mxu0
        %v677 = vadd.f32 %v634, %v676
        %v678 = vpop.f32.mrf.mxu0
        %v679 = vadd.f32 %v636, %v678
        %680 = vmatmul.bf16.gmra.mxu0 %v430
        %v681 = vpop.f32.mrf.mxu0
        %v682 = vadd.f32 %v639, %v681
        %v683 = vpop.f32.mrf.mxu0
        %v684 = vadd.f32 %v641, %v683
        %685 = vmatmul.bf16.gmra.mxu0 %v432
        %v686 = vpop.f32.mrf.mxu0
        %v687 = vadd.f32 %v644, %v686
        %v688 = vpop.f32.mrf.mxu0
        %v689 = vadd.f32 %v646, %v688
        %690 = vmatmul.bf16.gmra.mxu0 %v434
        %v691 = vpop.f32.mrf.mxu0
        %v692 = vadd.f32 %v649, %v691
        %v693 = vpop.f32.mrf.mxu0
        %694 = vdwg.mxu0
        %695 = vmatpush.bf16.msra.mxu0 %v560
        %696 = vmatpush.bf16.msra.mxu0 %v558
        %697 = vmatpush.bf16.msra.mxu0 %v556
        %698 = vmatpush.bf16.msra.mxu0 %v554
        %699 = vmatpush.bf16.msra.mxu0 %v552
        %700 = vmatpush.bf16.msra.mxu0 %v550
        %701 = vmatpush.bf16.msra.mxu0 %v548
        %702 = vmatpush.bf16.msra.mxu0 %v546
        %703 = vmatmul.bf16.gmra.mxu0 %v421
        %v704 = vpop.f32.mrf.mxu0
        %v705 = vadd.f32 %v379, %v704
        %v706 = vpop.f32.mrf.mxu0
        %v707 = vadd.f32 %v379, %v706
        %708 = vmatmul.bf16.gmra.mxu0 %v423
        %v709 = vpop.f32.mrf.mxu0
        %v710 = vadd.f32 %v379, %v709
        %v711 = vpop.f32.mrf.mxu0
        %v712 = vadd.f32 %v379, %v711
        %713 = vmatmul.bf16.gmra.mxu0 %v425
        %v714 = vpop.f32.mrf.mxu0
        %v715 = vadd.f32 %v379, %v714
        %v716 = vpop.f32.mrf.mxu0
        %v717 = vadd.f32 %v379, %v716
        %718 = vmatmul.bf16.gmra.mxu0 %v427
        %v719 = vpop.f32.mrf.mxu0
        %v720 = vadd.f32 %v379, %v719
        %v721 = vpop.f32.mrf.mxu0
        %v722 = vadd.f32 %v379, %v721
        %723 = vmatmul.bf16.gmra.mxu0 %v429
        %v724 = vpop.f32.mrf.mxu0
        %v725 = vadd.f32 %v379, %v724
        %v726 = vpop.f32.mrf.mxu0
        %v727 = vadd.f32 %v379, %v726
        %728 = vmatmul.bf16.gmra.mxu0 %v431
        %v729 = vpop.f32.mrf.mxu0
        %v730 = vadd.f32 %v379, %v729
        %v731 = vpop.f32.mrf.mxu0
        %v732 = vadd.f32 %v379, %v731
        %733 = vmatmul.bf16.gmra.mxu0 %v433
        %v734 = vpop.f32.mrf.mxu0
        %v735 = vadd.f32 %v379, %v734
        %v736 = vpop.f32.mrf.mxu0
        %737 = vdwg.mxu0
        %738 = vmatpush.bf16.msra.mxu0 %v576
        %739 = vmatpush.bf16.msra.mxu0 %v574
        %740 = vmatpush.bf16.msra.mxu0 %v572
        %741 = vmatpush.bf16.msra.mxu0 %v570
        %742 = vmatpush.bf16.msra.mxu0 %v568
        %743 = vmatpush.bf16.msra.mxu0 %v566
        %744 = vmatpush.bf16.msra.mxu0 %v564
        %745 = vmatpush.bf16.msra.mxu0 %v562
        %746 = vmatmul.bf16.gmra.mxu0 %v422
        %v747 = vpop.f32.mrf.mxu0
        %v748 = vadd.f32 %v705, %v747
        %v749 = vpop.f32.mrf.mxu0
        %v750 = vadd.f32 %v707, %v749
        %751 = vmatmul.bf16.gmra.mxu0 %v424
        %v752 = vpop.f32.mrf.mxu0
        %v753 = vadd.f32 %v710, %v752
        %v754 = vpop.f32.mrf.mxu0
        %v755 = vadd.f32 %v712, %v754
        %756 = vmatmul.bf16.gmra.mxu0 %v426
        %v757 = vpop.f32.mrf.mxu0
        %v758 = vadd.f32 %v715, %v757
        %v759 = vpop.f32.mrf.mxu0
        %v760 = vadd.f32 %v717, %v759
        %761 = vmatmul.bf16.gmra.mxu0 %v428
        %v762 = vpop.f32.mrf.mxu0
        %v763 = vadd.f32 %v720, %v762
        %v764 = vpop.f32.mrf.mxu0
        %v765 = vadd.f32 %v722, %v764
        %766 = vmatmul.bf16.gmra.mxu0 %v430
        %v767 = vpop.f32.mrf.mxu0
        %v768 = vadd.f32 %v725, %v767
        %v769 = vpop.f32.mrf.mxu0
        %v770 = vadd.f32 %v727, %v769
        %771 = vmatmul.bf16.gmra.mxu0 %v432
        %v772 = vpop.f32.mrf.mxu0
        %v773 = vadd.f32 %v730, %v772
        %v774 = vpop.f32.mrf.mxu0
        %v775 = vadd.f32 %v732, %v774
        %776 = vmatmul.bf16.gmra.mxu0 %v434
        %v777 = vpop.f32.mrf.mxu0
        %v778 = vadd.f32 %v735, %v777
        %v779 = vpop.f32.mrf.mxu0
        %780 = vdwg.mxu0
        %v781 = vmax.f32 %v662, 0.0
        %v782 = vmax.f32 %v748, 0.0
        %v783 = vmax.f32 %v664, 0.0
        %v784 = vmax.f32 %v750, 0.0
        %v785 = vmax.f32 %v667, 0.0
        %v786 = vmax.f32 %v753, 0.0
        %v787 = vmax.f32 %v669, 0.0
        %v788 = vmax.f32 %v755, 0.0
        %v789 = vmax.f32 %v672, 0.0
        %v790 = vmax.f32 %v758, 0.0
        %v791 = vmax.f32 %v674, 0.0
        %v792 = vmax.f32 %v760, 0.0
        %v793 = vmax.f32 %v677, 0.0
        %v794 = vmax.f32 %v763, 0.0
        %v795 = vmax.f32 %v679, 0.0
        %v796 = vmax.f32 %v765, 0.0
        %v797 = vmax.f32 %v682, 0.0
        %v798 = vmax.f32 %v768, 0.0
        %v799 = vmax.f32 %v684, 0.0
        %v800 = vmax.f32 %v770, 0.0
        %v801 = vmax.f32 %v687, 0.0
        %v802 = vmax.f32 %v773, 0.0
        %v803 = vmax.f32 %v689, 0.0
        %v804 = vmax.f32 %v775, 0.0
        %v805 = vmax.f32 %v692, 0.0
        %v806 = vmax.f32 %v778, 0.0
        %807 = vst [vmem:[#allocation2] sm:$0xff] %v781
        %vm808 = vcmask 654336
        %809 = vst.msk [vmem:[#allocation2 + $0x8] sm:$0xff] %vm808, %v782
        %810 = vst [vmem:[#allocation2 + $0x10] sm:$0xff] %v783
        %811 = vst.msk [vmem:[#allocation2 + $0x18] sm:$0xff] %vm808, %v784
        %812 = vst [vmem:[#allocation2 + $0x20] sm:$0xff] %v785
        %813 = vst.msk [vmem:[#allocation2 + $0x28] sm:$0xff] %vm808, %v786
        %814 = vst [vmem:[#allocation2 + $0x30] sm:$0xff] %v787
        %815 = vst.msk [vmem:[#allocation2 + $0x38] sm:$0xff] %vm808, %v788
        %816 = vst [vmem:[#allocation2 + $0x40] sm:$0xff] %v789
        %817 = vst.msk [vmem:[#allocation2 + $0x48] sm:$0xff] %vm808, %v790
        %818 = vst [vmem:[#allocation2 + $0x50] sm:$0xff] %v791
        %819 = vst.msk [vmem:[#allocation2 + $0x58] sm:$0xff] %vm808, %v792
        %820 = vst [vmem:[#allocation2 + $0x60] sm:$0xff] %v793
        %821 = vst.msk [vmem:[#allocation2 + $0x68] sm:$0xff] %vm808, %v794
        %822 = vst [vmem:[#allocation2 + $0x70] sm:$0xff] %v795
        %823 = vst.msk [vmem:[#allocation2 + $0x78] sm:$0xff] %vm808, %v796
        %824 = vst [vmem:[#allocation2 + $0x80] sm:$0xff] %v797
        %825 = vst.msk [vmem:[#allocation2 + $0x88] sm:$0xff] %vm808, %v798
        %826 = vst [vmem:[#allocation2 + $0x90] sm:$0xff] %v799
        %827 = vst.msk [vmem:[#allocation2 + $0x98] sm:$0xff] %vm808, %v800
        %828 = vst [vmem:[#allocation2 + $0xa0] sm:$0xff] %v801
        %829 = vst.msk [vmem:[#allocation2 + $0xa8] sm:$0xff] %vm808, %v802
        %830 = vst [vmem:[#allocation2 + $0xb0] sm:$0xff] %v803
        %831 = vst.msk [vmem:[#allocation2 + $0xb8] sm:$0xff] %vm808, %v804
        %832 = vst [vmem:[#allocation2 + $0xc0] sm:$0xff] %v805
        %833 = vst.msk [vmem:[#allocation2 + $0xc8] sm:$0xff] %vm808, %v806
        %v834 = vld [vmem:[#allocation2] sm:$0xff]
        %v835 = vld [vmem:[#allocation2 + $0x10] sm:$0xff]
        %v836 = vld [vmem:[#allocation2 + $0x20] sm:$0xff]
        %v837 = vld [vmem:[#allocation2 + $0x30] sm:$0xff]
        %v838 = vld [vmem:[#allocation2 + $0x40] sm:$0xff]
        %v839 = vld [vmem:[#allocation2 + $0x50] sm:$0xff]
        %v840 = vld [vmem:[#allocation2 + $0x60] sm:$0xff]
        %v841 = vld [vmem:[#allocation2 + $0x70] sm:$0xff]
        %v842 = vld [vmem:[#allocation2 + $0x80] sm:$0xff]
        %v843 = vld [vmem:[#allocation2 + $0x90] sm:$0xff]
        %v844 = vld [vmem:[#allocation2 + $0xa0] sm:$0xff]
        %v845 = vld [vmem:[#allocation2 + $0xb0] sm:$0xff]
        %v846 = vld [vmem:[#allocation2 + $0xc0] sm:$0xff]
        %v847 = vld [vmem:[#allocation2 + $0x8] sm:$0xff]
        %v848 = vld [vmem:[#allocation2 + $0x18] sm:$0xff]
        %v849 = vld [vmem:[#allocation2 + $0x28] sm:$0xff]
        %v850 = vld [vmem:[#allocation2 + $0x38] sm:$0xff]
        %v851 = vld [vmem:[#allocation2 + $0x48] sm:$0xff]
        %v852 = vld [vmem:[#allocation2 + $0x58] sm:$0xff]
        %v853 = vld [vmem:[#allocation2 + $0x68] sm:$0xff]
        %v854 = vld [vmem:[#allocation2 + $0x78] sm:$0xff]
        %v855 = vld [vmem:[#allocation2 + $0x88] sm:$0xff]
        %v856 = vld [vmem:[#allocation2 + $0x98] sm:$0xff]
        %v857 = vld [vmem:[#allocation2 + $0xa8] sm:$0xff]
        %v858 = vld [vmem:[#allocation2 + $0xb8] sm:$0xff]
        %v859 = vld [vmem:[#allocation2 + $0xc8] sm:$0xff]
        %886 = vrot.lane.b32.xlu0 %v834, 16
        %v887 = vpop.permute.xlu0 %886
        %888 = vrot.lane.b32.xlu0 %v847, 16
        %v889 = vpop.permute.xlu0 %888
        %890 = vrot.lane.b32.xlu0 %v835, 16
        %v891 = vpop.permute.xlu0 %890
        %892 = vrot.lane.b32.xlu0 %v848, 16
        %v893 = vpop.permute.xlu0 %892
        %894 = vrot.lane.b32.xlu0 %v836, 16
        %v895 = vpop.permute.xlu0 %894
        %896 = vrot.lane.b32.xlu0 %v849, 16
        %v897 = vpop.permute.xlu0 %896
        %898 = vrot.lane.b32.xlu0 %v837, 16
        %v899 = vpop.permute.xlu0 %898
        %900 = vrot.lane.b32.xlu0 %v850, 16
        %v901 = vpop.permute.xlu0 %900
        %902 = vrot.lane.b32.xlu0 %v838, 16
        %v903 = vpop.permute.xlu0 %902
        %904 = vrot.lane.b32.xlu0 %v851, 16
        %v905 = vpop.permute.xlu0 %904
        %906 = vrot.lane.b32.xlu0 %v839, 16
        %v907 = vpop.permute.xlu0 %906
        %908 = vrot.lane.b32.xlu0 %v852, 16
        %v909 = vpop.permute.xlu0 %908
        %910 = vrot.lane.b32.xlu0 %v840, 16
        %v911 = vpop.permute.xlu0 %910
        %912 = vrot.lane.b32.xlu0 %v853, 16
        %v913 = vpop.permute.xlu0 %912
        %914 = vrot.lane.b32.xlu0 %v841, 16
        %v915 = vpop.permute.xlu0 %914
        %916 = vrot.lane.b32.xlu0 %v854, 16
        %v917 = vpop.permute.xlu0 %916
        %918 = vrot.lane.b32.xlu0 %v842, 16
        %v919 = vpop.permute.xlu0 %918
        %920 = vrot.lane.b32.xlu0 %v855, 16
        %v921 = vpop.permute.xlu0 %920
        %922 = vrot.lane.b32.xlu0 %v843, 16
        %v923 = vpop.permute.xlu0 %922
        %924 = vrot.lane.b32.xlu0 %v856, 16
        %v925 = vpop.permute.xlu0 %924
        %926 = vrot.lane.b32.xlu0 %v844, 16
        %v927 = vpop.permute.xlu0 %926
        %928 = vrot.lane.b32.xlu0 %v857, 16
        %v929 = vpop.permute.xlu0 %928
        %930 = vrot.lane.b32.xlu0 %v845, 16
        %v931 = vpop.permute.xlu0 %930
        %932 = vrot.lane.b32.xlu0 %v858, 16
        %v933 = vpop.permute.xlu0 %932
        %934 = vrot.lane.b32.xlu0 %v846, 16
        %v935 = vpop.permute.xlu0 %934
        %936 = vrot.lane.b32.xlu0 %v859, 16
        %v937 = vpop.permute.xlu0 %936
        %vm938 = vcmask 130048
        %v939 = vsel %vm938, %v887, %v889
        %v940 = vsel %vm938, %v891, %v893
        %v941 = vsel %vm938, %v895, %v897
        %v942 = vsel %vm938, %v899, %v901
        %v943 = vsel %vm938, %v903, %v905
        %v944 = vsel %vm938, %v907, %v909
        %v945 = vsel %vm938, %v911, %v913
        %v946 = vsel %vm938, %v915, %v917
        %v947 = vsel %vm938, %v919, %v921
        %v948 = vsel %vm938, %v923, %v925
        %v949 = vsel %vm938, %v927, %v929
        %v950 = vsel %vm938, %v931, %v933
        %v951 = vsel %vm938, %v935, %v937
        %v965 = vmax.f32 %v834, %v939
        %v966 = vmax.f32 %v835, %v940
        %v967 = vmax.f32 %v836, %v941
        %v968 = vmax.f32 %v837, %v942
        %v969 = vmax.f32 %v838, %v943
        %v970 = vmax.f32 %v839, %v944
        %v971 = vmax.f32 %v840, %v945
        %v972 = vmax.f32 %v841, %v946
        %v973 = vmax.f32 %v842, %v947
        %v974 = vmax.f32 %v843, %v948
        %v975 = vmax.f32 %v844, %v949
        %v976 = vmax.f32 %v845, %v950
        %v977 = vmax.f32 %v846, %v951
        %978 = vrot.lane.b32.xlu0 %v834, 96
        %v979 = vpop.permute.xlu0 %978
        %980 = vrot.lane.b32.xlu0 %v835, 96
        %v981 = vpop.permute.xlu0 %980
        %982 = vrot.lane.b32.xlu0 %v836, 96
        %v983 = vpop.permute.xlu0 %982
        %984 = vrot.lane.b32.xlu0 %v837, 96
        %v985 = vpop.permute.xlu0 %984
        %986 = vrot.lane.b32.xlu0 %v838, 96
        %v987 = vpop.permute.xlu0 %986
        %988 = vrot.lane.b32.xlu0 %v839, 96
        %v989 = vpop.permute.xlu0 %988
        %990 = vrot.lane.b32.xlu0 %v840, 96
        %v991 = vpop.permute.xlu0 %990
        %992 = vrot.lane.b32.xlu0 %v841, 96
        %v993 = vpop.permute.xlu0 %992
        %994 = vrot.lane.b32.xlu0 %v842, 96
        %v995 = vpop.permute.xlu0 %994
        %996 = vrot.lane.b32.xlu0 %v843, 96
        %v997 = vpop.permute.xlu0 %996
        %998 = vrot.lane.b32.xlu0 %v844, 96
        %v999 = vpop.permute.xlu0 %998
        %1000 = vrot.lane.b32.xlu0 %v845, 96
        %v1001 = vpop.permute.xlu0 %1000
        %1002 = vrot.lane.b32.xlu0 %v846, 96
        %v1003 = vpop.permute.xlu0 %1002
        %v1017 = vmax.f32 %v834, %v979
        %v1018 = vmax.f32 %v847, %v979
        %v1019 = vmax.f32 %v835, %v981
        %v1020 = vmax.f32 %v848, %v981
        %v1021 = vmax.f32 %v836, %v983
        %v1022 = vmax.f32 %v849, %v983
        %v1023 = vmax.f32 %v837, %v985
        %v1024 = vmax.f32 %v850, %v985
        %v1025 = vmax.f32 %v838, %v987
        %v1026 = vmax.f32 %v851, %v987
        %v1027 = vmax.f32 %v839, %v989
        %v1028 = vmax.f32 %v852, %v989
        %v1029 = vmax.f32 %v840, %v991
        %v1030 = vmax.f32 %v853, %v991
        %v1031 = vmax.f32 %v841, %v993
        %v1032 = vmax.f32 %v854, %v993
        %v1033 = vmax.f32 %v842, %v995
        %v1034 = vmax.f32 %v855, %v995
        %v1035 = vmax.f32 %v843, %v997
        %v1036 = vmax.f32 %v856, %v997
        %v1037 = vmax.f32 %v844, %v999
        %v1038 = vmax.f32 %v857, %v999
        %v1039 = vmax.f32 %v845, %v1001
        %v1040 = vmax.f32 %v858, %v1001
        %v1041 = vmax.f32 %v846, %v1003
        %v1042 = vmax.f32 %v859, %v1003
        %v1043 = vmax.f32 %v965, %v972
        %v1044 = vmax.f32 %v966, %v973
        %v1045 = vmax.f32 %v967, %v974
        %v1046 = vmax.f32 %v968, %v975
        %v1047 = vmax.f32 %v969, %v976
        %v1048 = vmax.f32 %v970, %v977
        %vm1049 = vcmask 785408
        %1050 = vst.msk [vmem:[#allocation3] sm:$0xff] %vm1049, %v1043
        %1051 = vst.msk [vmem:[#allocation3 + $0x8] sm:$0xff] %vm1049, %v1044
        %1052 = vst.msk [vmem:[#allocation3 + $0x10] sm:$0xff] %vm1049, %v1045
        %1053 = vst.msk [vmem:[#allocation3 + $0x18] sm:$0xff] %vm1049, %v1046
        %1054 = vst.msk [vmem:[#allocation3 + $0x20] sm:$0xff] %vm1049, %v1047
        %1055 = vst.msk [vmem:[#allocation3 + $0x28] sm:$0xff] %vm1049, %v1048
        %v1056 = vmax.f32 %v1017, %v1031
        %v1057 = vmax.f32 %v1018, %v1032
        %v1058 = vmax.f32 %v1019, %v1033
        %v1059 = vmax.f32 %v1020, %v1034
        %v1060 = vmax.f32 %v1021, %v1035
        %v1061 = vmax.f32 %v1022, %v1036
        %v1062 = vmax.f32 %v1023, %v1037
        %v1063 = vmax.f32 %v1024, %v1038
        %v1064 = vmax.f32 %v1025, %v1039
        %v1065 = vmax.f32 %v1026, %v1040
        %v1066 = vmax.f32 %v1027, %v1041
        %v1067 = vmax.f32 %v1028, %v1042
        %1080 = vrot.lane.b32.xlu0 %v1056, 16
        %v1081 = vpop.permute.xlu0 %1080
        %1082 = vrot.lane.b32.xlu0 %v1057, 16
        %v1083 = vpop.permute.xlu0 %1082
        %1084 = vrot.lane.b32.xlu0 %v1058, 16
        %v1085 = vpop.permute.xlu0 %1084
        %1086 = vrot.lane.b32.xlu0 %v1059, 16
        %v1087 = vpop.permute.xlu0 %1086
        %1088 = vrot.lane.b32.xlu0 %v1060, 16
        %v1089 = vpop.permute.xlu0 %1088
        %1090 = vrot.lane.b32.xlu0 %v1061, 16
        %v1091 = vpop.permute.xlu0 %1090
        %1092 = vrot.lane.b32.xlu0 %v1062, 16
        %v1093 = vpop.permute.xlu0 %1092
        %1094 = vrot.lane.b32.xlu0 %v1063, 16
        %v1095 = vpop.permute.xlu0 %1094
        %1096 = vrot.lane.b32.xlu0 %v1064, 16
        %v1097 = vpop.permute.xlu0 %1096
        %1098 = vrot.lane.b32.xlu0 %v1065, 16
        %v1099 = vpop.permute.xlu0 %1098
        %1100 = vrot.lane.b32.xlu0 %v1066, 16
        %v1101 = vpop.permute.xlu0 %1100
        %1102 = vrot.lane.b32.xlu0 %v1067, 16
        %v1103 = vpop.permute.xlu0 %1102
        %v1104 = vsel %vm938, %v1081, %v1083
        %v1105 = vsel %vm938, %v1085, %v1087
        %v1106 = vsel %vm938, %v1089, %v1091
        %v1107 = vsel %vm938, %v1093, %v1095
        %v1108 = vsel %vm938, %v1097, %v1099
        %v1109 = vsel %vm938, %v1101, %v1103
        %s1116 = scalar_lea.vmem [#allocation3], 48
        %1117 = vst.msk [vmem:[%s1116] sm:$0xff] %vm1049, %v1104
        %1118 = vst.msk [vmem:[%s1116 + $0x8] sm:$0xff] %vm1049, %v1105
        %1119 = vst.msk [vmem:[%s1116 + $0x10] sm:$0xff] %vm1049, %v1106
        %1120 = vst.msk [vmem:[%s1116 + $0x18] sm:$0xff] %vm1049, %v1107
        %1121 = vst.msk [vmem:[%s1116 + $0x20] sm:$0xff] %vm1049, %v1108
        %1122 = vst.msk [vmem:[%s1116 + $0x28] sm:$0xff] %vm1049, %v1109
        %v1123 = vmax.f32 %v972, %v966
        %v1124 = vmax.f32 %v973, %v967
        %v1125 = vmax.f32 %v974, %v968
        %v1126 = vmax.f32 %v975, %v969
        %v1127 = vmax.f32 %v976, %v970
        %v1128 = vmax.f32 %v977, %v971
        %s1129 = scalar_lea.vmem [#allocation3], 96
        %1130 = vst.msk [vmem:[%s1129] sm:$0xff] %vm1049, %v1123
        %1131 = vst.msk [vmem:[%s1129 + $0x8] sm:$0xff] %vm1049, %v1124
        %1132 = vst.msk [vmem:[%s1129 + $0x10] sm:$0xff] %vm1049, %v1125
        %1133 = vst.msk [vmem:[%s1129 + $0x18] sm:$0xff] %vm1049, %v1126
        %1134 = vst.msk [vmem:[%s1129 + $0x20] sm:$0xff] %vm1049, %v1127
        %1135 = vst.msk [vmem:[%s1129 + $0x28] sm:$0xff] %vm1049, %v1128
        %v1136 = vmax.f32 %v1031, %v1019
        %v1137 = vmax.f32 %v1032, %v1020
        %v1138 = vmax.f32 %v1033, %v1021
        %v1139 = vmax.f32 %v1034, %v1022
        %v1140 = vmax.f32 %v1035, %v1023
        %v1141 = vmax.f32 %v1036, %v1024
        %v1142 = vmax.f32 %v1037, %v1025
        %v1143 = vmax.f32 %v1038, %v1026
        %v1144 = vmax.f32 %v1039, %v1027
        %v1145 = vmax.f32 %v1040, %v1028
        %v1146 = vmax.f32 %v1041, %v1029
        %v1147 = vmax.f32 %v1042, %v1030
        %1160 = vrot.lane.b32.xlu0 %v1136, 16
        %v1161 = vpop.permute.xlu0 %1160
        %1162 = vrot.lane.b32.xlu0 %v1137, 16
        %v1163 = vpop.permute.xlu0 %1162
        %1164 = vrot.lane.b32.xlu0 %v1138, 16
        %v1165 = vpop.permute.xlu0 %1164
        %1166 = vrot.lane.b32.xlu0 %v1139, 16
        %v1167 = vpop.permute.xlu0 %1166
        %1168 = vrot.lane.b32.xlu0 %v1140, 16
        %v1169 = vpop.permute.xlu0 %1168
        %1170 = vrot.lane.b32.xlu0 %v1141, 16
        %v1171 = vpop.permute.xlu0 %1170
        %1172 = vrot.lane.b32.xlu0 %v1142, 16
        %v1173 = vpop.permute.xlu0 %1172
        %1174 = vrot.lane.b32.xlu0 %v1143, 16
        %v1175 = vpop.permute.xlu0 %1174
        %1176 = vrot.lane.b32.xlu0 %v1144, 16
        %v1177 = vpop.permute.xlu0 %1176
        %1178 = vrot.lane.b32.xlu0 %v1145, 16
        %v1179 = vpop.permute.xlu0 %1178
        %1180 = vrot.lane.b32.xlu0 %v1146, 16
        %v1181 = vpop.permute.xlu0 %1180
        %1182 = vrot.lane.b32.xlu0 %v1147, 16
        %v1183 = vpop.permute.xlu0 %1182
        %v1184 = vsel %vm938, %v1161, %v1163
        %v1185 = vsel %vm938, %v1165, %v1167
        %v1186 = vsel %vm938, %v1169, %v1171
        %v1187 = vsel %vm938, %v1173, %v1175
        %v1188 = vsel %vm938, %v1177, %v1179
        %v1189 = vsel %vm938, %v1181, %v1183
        %s1196 = scalar_lea.vmem [#allocation3], 144
        %1197 = vst.msk [vmem:[%s1196] sm:$0xff] %vm1049, %v1184
        %1198 = vst.msk [vmem:[%s1196 + $0x8] sm:$0xff] %vm1049, %v1185
        %1199 = vst.msk [vmem:[%s1196 + $0x10] sm:$0xff] %vm1049, %v1186
        %1200 = vst.msk [vmem:[%s1196 + $0x18] sm:$0xff] %vm1049, %v1187
        %1201 = vst.msk [vmem:[%s1196 + $0x20] sm:$0xff] %vm1049, %v1188
        %1202 = vst.msk [vmem:[%s1196 + $0x28] sm:$0xff] %vm1049, %v1189
        %v1203 = vld [vmem:[#allocation3] sm:$0xff]
        %v1204 = vld [vmem:[#allocation3 + $0x8] sm:$0xff]
        %v1205 = vld [vmem:[#allocation3 + $0x10] sm:$0xff]
        %v1206 = vld [vmem:[#allocation3 + $0x18] sm:$0xff]
        %v1207 = vld [vmem:[#allocation3 + $0x20] sm:$0xff]
        %v1208 = vld [vmem:[%s3] sm:$0xff]
        %v1209 = vld [vmem:[%s3 + $0x8] sm:$0xff]
        %v1210 = vld [vmem:[%s3 + $0x10] sm:$0xff]
        %v1211 = vld [vmem:[%s3 + $0x18] sm:$0xff]
        %v1212 = vld [vmem:[%s3 + $0x20] sm:$0xff]
        %v1213 = vld [vmem:[%s3 + $0x28] sm:$0xff]
        %v1214 = vld [vmem:[%s3 + $0x30] sm:$0xff]
        %v1215 = vld [vmem:[%s3 + $0x38] sm:$0xff]
        %v1216 = vld [vmem:[%s3 + $0x40] sm:$0xff]
        %v1217 = vld [vmem:[%s3 + $0x48] sm:$0xff]
        %v1218 = vld [vmem:[%s3 + $0x50] sm:$0xff]
        %v1219 = vld [vmem:[%s3 + $0x58] sm:$0xff]
        %v1220 = vld [vmem:[%s3 + $0x60] sm:$0xff]
        %v1221 = vld [vmem:[%s3 + $0x68] sm:$0xff]
        %v1222 = vld [vmem:[%s3 + $0x70] sm:$0xff]
        %v1223 = vld [vmem:[%s3 + $0x78] sm:$0xff]
        %v1224 = vld [vmem:[%s3 + $0x80] sm:$0xff]
        %v1225 = vld [vmem:[%s3 + $0x88] sm:$0xff]
        %v1226 = vld [vmem:[%s3 + $0x90] sm:$0xff]
        %v1227 = vld [vmem:[%s3 + $0x98] sm:$0xff]
        %v1228 = vld [vmem:[%s3 + $0xa0] sm:$0xff]
        %v1229 = vld [vmem:[%s3 + $0xa8] sm:$0xff]
        %v1230 = vld [vmem:[%s3 + $0xb0] sm:$0xff]
        %v1231 = vld [vmem:[%s3 + $0xb8] sm:$0xff]
        %v1232 = vld [vmem:[%s1116] sm:$0xff]
        %v1233 = vld [vmem:[%s1116 + $0x8] sm:$0xff]
        %v1234 = vld [vmem:[%s1116 + $0x10] sm:$0xff]
        %v1235 = vld [vmem:[%s1116 + $0x18] sm:$0xff]
        %v1236 = vld [vmem:[%s1116 + $0x20] sm:$0xff]
        %s1237 = scalar_lea.vmem %s3, 192
        %v1238 = vld [vmem:[%s1237] sm:$0xff]
        %v1239 = vld [vmem:[%s1237 + $0x8] sm:$0xff]
        %v1240 = vld [vmem:[%s1237 + $0x10] sm:$0xff]
        %v1241 = vld [vmem:[%s1237 + $0x18] sm:$0xff]
        %v1242 = vld [vmem:[%s1237 + $0x20] sm:$0xff]
        %v1243 = vld [vmem:[%s1237 + $0x28] sm:$0xff]
        %v1244 = vld [vmem:[%s1237 + $0x30] sm:$0xff]
        %v1245 = vld [vmem:[%s1237 + $0x38] sm:$0xff]
        %v1246 = vld [vmem:[%s1237 + $0x40] sm:$0xff]
        %v1247 = vld [vmem:[%s1237 + $0x48] sm:$0xff]
        %v1248 = vld [vmem:[%s1237 + $0x50] sm:$0xff]
        %v1249 = vld [vmem:[%s1237 + $0x58] sm:$0xff]
        %v1250 = vld [vmem:[%s1237 + $0x60] sm:$0xff]
        %v1251 = vld [vmem:[%s1237 + $0x68] sm:$0xff]
        %v1252 = vld [vmem:[%s1237 + $0x70] sm:$0xff]
        %v1253 = vld [vmem:[%s1237 + $0x78] sm:$0xff]
        %v1254 = vld [vmem:[%s1237 + $0x80] sm:$0xff]
        %v1255 = vld [vmem:[%s1237 + $0x88] sm:$0xff]
        %v1256 = vld [vmem:[%s1237 + $0x90] sm:$0xff]
        %v1257 = vld [vmem:[%s1237 + $0x98] sm:$0xff]
        %v1258 = vld [vmem:[%s1237 + $0xa0] sm:$0xff]
        %v1259 = vld [vmem:[%s1237 + $0xa8] sm:$0xff]
        %v1260 = vld [vmem:[%s1237 + $0xb0] sm:$0xff]
        %v1261 = vld [vmem:[%s1237 + $0xb8] sm:$0xff]
        %v1263 = vsel %vm1049, %v1232, 0
        %v1266 = vsel %vm1049, %v1233, 0
        %v1269 = vsel %vm1049, %v1234, 0
        %v1272 = vsel %vm1049, %v1235, 0
        %v1275 = vsel %vm1049, %v1236, 0
        %1277 = vmatpush.msra.mxu0 0.0
        %1278 = vmatpush.msra.mxu0 0.0
        %1279 = vmatpush.msra.mxu0 0.0
        %1280 = vmatpush.msra.mxu0 0.0
        %1281 = vmatpush.msra.mxu0 %v1260
        %1282 = vmatpush.msra.mxu0 %v1258
        %1283 = vmatpush.msra.mxu0 %v1256
        %1284 = vmatpush.msra.mxu0 %v1254
        %1285 = vmatpush.msra.mxu0 %v1252
        %1286 = vmatpush.msra.mxu0 %v1250
        %1287 = vmatpush.msra.mxu0 %v1248
        %1288 = vmatpush.msra.mxu0 %v1246
        %1289 = vmatpush.msra.mxu0 %v1244
        %1290 = vmatpush.msra.mxu0 %v1242
        %1291 = vmatpush.msra.mxu0 %v1240
        %1292 = vmatpush.msra.mxu0 %v1238
        %1293 = vmatmul.f32.gmra.mxu0 %v1263
        %v1294 = vpop.f32.mrf.mxu0
        %v1295 = vadd.f32 0.0, %v1294
        %1296 = vmatmul.f32.gmra.mxu0 %v1266
        %v1297 = vpop.f32.mrf.mxu0
        %v1298 = vadd.f32 0.0, %v1297
        %1299 = vmatmul.f32.gmra.mxu0 %v1269
        %v1300 = vpop.f32.mrf.mxu0
        %v1301 = vadd.f32 0.0, %v1300
        %1302 = vmatmul.f32.gmra.mxu0 %v1272
        %v1303 = vpop.f32.mrf.mxu0
        %v1304 = vadd.f32 0.0, %v1303
        %1305 = vmatmul.f32.gmra.mxu0 %v1275
        %v1306 = vpop.f32.mrf.mxu0
        %v1307 = vadd.f32 0.0, %v1306
        %1308 = vdwg.mxu0
        %1309 = vmatpush.msra.mxu0 0.0
        %1310 = vmatpush.msra.mxu0 0.0
        %1311 = vmatpush.msra.mxu0 0.0
        %1312 = vmatpush.msra.mxu0 0.0
        %1313 = vmatpush.msra.mxu0 %v1261
        %1314 = vmatpush.msra.mxu0 %v1259
        %1315 = vmatpush.msra.mxu0 %v1257
        %1316 = vmatpush.msra.mxu0 %v1255
        %1317 = vmatpush.msra.mxu0 %v1253
        %1318 = vmatpush.msra.mxu0 %v1251
        %1319 = vmatpush.msra.mxu0 %v1249
        %1320 = vmatpush.msra.mxu0 %v1247
        %1321 = vmatpush.msra.mxu0 %v1245
        %1322 = vmatpush.msra.mxu0 %v1243
        %1323 = vmatpush.msra.mxu0 %v1241
        %1324 = vmatpush.msra.mxu0 %v1239
        %1325 = vmatmul.f32.gmra.mxu0 %v1263
        %v1326 = vpop.f32.mrf.mxu0
        %v1327 = vadd.f32 0.0, %v1326
        %1328 = vmatmul.f32.gmra.mxu0 %v1266
        %v1329 = vpop.f32.mrf.mxu0
        %v1330 = vadd.f32 0.0, %v1329
        %1331 = vmatmul.f32.gmra.mxu0 %v1269
        %v1332 = vpop.f32.mrf.mxu0
        %v1333 = vadd.f32 0.0, %v1332
        %1334 = vmatmul.f32.gmra.mxu0 %v1272
        %v1335 = vpop.f32.mrf.mxu0
        %v1336 = vadd.f32 0.0, %v1335
        %1337 = vmatmul.f32.gmra.mxu0 %v1275
        %v1338 = vpop.f32.mrf.mxu0
        %v1339 = vadd.f32 0.0, %v1338
        %1340 = vdwg.mxu0
        %v1342 = vsel %vm1049, %v1203, 0
        %v1345 = vsel %vm1049, %v1204, 0
        %v1348 = vsel %vm1049, %v1205, 0
        %v1351 = vsel %vm1049, %v1206, 0
        %v1354 = vsel %vm1049, %v1207, 0
        %1356 = vmatpush.msra.mxu0 0.0
        %1357 = vmatpush.msra.mxu0 0.0
        %1358 = vmatpush.msra.mxu0 0.0
        %1359 = vmatpush.msra.mxu0 0.0
        %1360 = vmatpush.msra.mxu0 %v1230
        %1361 = vmatpush.msra.mxu0 %v1228
        %1362 = vmatpush.msra.mxu0 %v1226
        %1363 = vmatpush.msra.mxu0 %v1224
        %1364 = vmatpush.msra.mxu0 %v1222
        %1365 = vmatpush.msra.mxu0 %v1220
        %1366 = vmatpush.msra.mxu0 %v1218
        %1367 = vmatpush.msra.mxu0 %v1216
        %1368 = vmatpush.msra.mxu0 %v1214
        %1369 = vmatpush.msra.mxu0 %v1212
        %1370 = vmatpush.msra.mxu0 %v1210
        %1371 = vmatpush.msra.mxu0 %v1208
        %1372 = vmatmul.f32.gmra.mxu0 %v1342
        %v1373 = vpop.f32.mrf.mxu0
        %v1374 = vadd.f32 %v1295, %v1373
        %1375 = vmatmul.f32.gmra.mxu0 %v1345
        %v1376 = vpop.f32.mrf.mxu0
        %v1377 = vadd.f32 %v1298, %v1376
        %1378 = vmatmul.f32.gmra.mxu0 %v1348
        %v1379 = vpop.f32.mrf.mxu0
        %v1380 = vadd.f32 %v1301, %v1379
        %1381 = vmatmul.f32.gmra.mxu0 %v1351
        %v1382 = vpop.f32.mrf.mxu0
        %v1383 = vadd.f32 %v1304, %v1382
        %1384 = vmatmul.f32.gmra.mxu0 %v1354
        %v1385 = vpop.f32.mrf.mxu0
        %v1386 = vadd.f32 %v1307, %v1385
        %1387 = vdwg.mxu0
        %1388 = vmatpush.msra.mxu0 0.0
        %1389 = vmatpush.msra.mxu0 0.0
        %1390 = vmatpush.msra.mxu0 0.0
        %1391 = vmatpush.msra.mxu0 0.0
        %1392 = vmatpush.msra.mxu0 %v1231
        %1393 = vmatpush.msra.mxu0 %v1229
        %1394 = vmatpush.msra.mxu0 %v1227
        %1395 = vmatpush.msra.mxu0 %v1225
        %1396 = vmatpush.msra.mxu0 %v1223
        %1397 = vmatpush.msra.mxu0 %v1221
        %1398 = vmatpush.msra.mxu0 %v1219
        %1399 = vmatpush.msra.mxu0 %v1217
        %1400 = vmatpush.msra.mxu0 %v1215
        %1401 = vmatpush.msra.mxu0 %v1213
        %1402 = vmatpush.msra.mxu0 %v1211
        %1403 = vmatpush.msra.mxu0 %v1209
        %1404 = vmatmul.f32.gmra.mxu0 %v1342
        %v1405 = vpop.f32.mrf.mxu0
        %v1406 = vadd.f32 %v1327, %v1405
        %1407 = vmatmul.f32.gmra.mxu0 %v1345
        %v1408 = vpop.f32.mrf.mxu0
        %v1409 = vadd.f32 %v1330, %v1408
        %1410 = vmatmul.f32.gmra.mxu0 %v1348
        %v1411 = vpop.f32.mrf.mxu0
        %v1412 = vadd.f32 %v1333, %v1411
        %1413 = vmatmul.f32.gmra.mxu0 %v1351
        %v1414 = vpop.f32.mrf.mxu0
        %v1415 = vadd.f32 %v1336, %v1414
        %1416 = vmatmul.f32.gmra.mxu0 %v1354
        %v1417 = vpop.f32.mrf.mxu0
        %v1418 = vadd.f32 %v1339, %v1417
        %1419 = vdwg.mxu0
        %v1420 = vld [vmem:[%s1129] sm:$0xff]
        %v1421 = vld [vmem:[%s1129 + $0x8] sm:$0xff]
        %v1422 = vld [vmem:[%s1129 + $0x10] sm:$0xff]
        %v1423 = vld [vmem:[%s1129 + $0x18] sm:$0xff]
        %v1424 = vld [vmem:[%s1129 + $0x20] sm:$0xff]
        %s1425 = scalar_lea.vmem %s3, 384
        %v1426 = vld [vmem:[%s1425] sm:$0xff]
        %v1427 = vld [vmem:[%s1425 + $0x8] sm:$0xff]
        %v1428 = vld [vmem:[%s1425 + $0x10] sm:$0xff]
        %v1429 = vld [vmem:[%s1425 + $0x18] sm:$0xff]
        %v1430 = vld [vmem:[%s1425 + $0x20] sm:$0xff]
        %v1431 = vld [vmem:[%s1425 + $0x28] sm:$0xff]
        %v1432 = vld [vmem:[%s1425 + $0x30] sm:$0xff]
        %v1433 = vld [vmem:[%s1425 + $0x38] sm:$0xff]
        %v1434 = vld [vmem:[%s1425 + $0x40] sm:$0xff]
        %v1435 = vld [vmem:[%s1425 + $0x48] sm:$0xff]
        %v1436 = vld [vmem:[%s1425 + $0x50] sm:$0xff]
        %v1437 = vld [vmem:[%s1425 + $0x58] sm:$0xff]
        %v1438 = vld [vmem:[%s1425 + $0x60] sm:$0xff]
        %v1439 = vld [vmem:[%s1425 + $0x68] sm:$0xff]
        %v1440 = vld [vmem:[%s1425 + $0x70] sm:$0xff]
        %v1441 = vld [vmem:[%s1425 + $0x78] sm:$0xff]
        %v1442 = vld [vmem:[%s1425 + $0x80] sm:$0xff]
        %v1443 = vld [vmem:[%s1425 + $0x88] sm:$0xff]
        %v1444 = vld [vmem:[%s1425 + $0x90] sm:$0xff]
        %v1445 = vld [vmem:[%s1425 + $0x98] sm:$0xff]
        %v1446 = vld [vmem:[%s1425 + $0xa0] sm:$0xff]
        %v1447 = vld [vmem:[%s1425 + $0xa8] sm:$0xff]
        %v1448 = vld [vmem:[%s1425 + $0xb0] sm:$0xff]
        %v1449 = vld [vmem:[%s1425 + $0xb8] sm:$0xff]
        %v1451 = vsel %vm1049, %v1420, 0
        %v1454 = vsel %vm1049, %v1421, 0
        %v1457 = vsel %vm1049, %v1422, 0
        %v1460 = vsel %vm1049, %v1423, 0
        %v1463 = vsel %vm1049, %v1424, 0
        %1465 = vmatpush.msra.mxu0 0.0
        %1466 = vmatpush.msra.mxu0 0.0
        %1467 = vmatpush.msra.mxu0 0.0
        %1468 = vmatpush.msra.mxu0 0.0
        %1469 = vmatpush.msra.mxu0 %v1448
        %1470 = vmatpush.msra.mxu0 %v1446
        %1471 = vmatpush.msra.mxu0 %v1444
        %1472 = vmatpush.msra.mxu0 %v1442
        %1473 = vmatpush.msra.mxu0 %v1440
        %1474 = vmatpush.msra.mxu0 %v1438
        %1475 = vmatpush.msra.mxu0 %v1436
        %1476 = vmatpush.msra.mxu0 %v1434
        %1477 = vmatpush.msra.mxu0 %v1432
        %1478 = vmatpush.msra.mxu0 %v1430
        %1479 = vmatpush.msra.mxu0 %v1428
        %1480 = vmatpush.msra.mxu0 %v1426
        %1481 = vmatmul.f32.gmra.mxu0 %v1451
        %v1482 = vpop.f32.mrf.mxu0
        %v1483 = vadd.f32 0.0, %v1482
        %1484 = vmatmul.f32.gmra.mxu0 %v1454
        %v1485 = vpop.f32.mrf.mxu0
        %v1486 = vadd.f32 0.0, %v1485
        %1487 = vmatmul.f32.gmra.mxu0 %v1457
        %v1488 = vpop.f32.mrf.mxu0
        %v1489 = vadd.f32 0.0, %v1488
        %1490 = vmatmul.f32.gmra.mxu0 %v1460
        %v1491 = vpop.f32.mrf.mxu0
        %v1492 = vadd.f32 0.0, %v1491
        %1493 = vmatmul.f32.gmra.mxu0 %v1463
        %v1494 = vpop.f32.mrf.mxu0
        %v1495 = vadd.f32 0.0, %v1494
        %1496 = vdwg.mxu0
        %1497 = vmatpush.msra.mxu0 0.0
        %1498 = vmatpush.msra.mxu0 0.0
        %1499 = vmatpush.msra.mxu0 0.0
        %1500 = vmatpush.msra.mxu0 0.0
        %1501 = vmatpush.msra.mxu0 %v1449
        %1502 = vmatpush.msra.mxu0 %v1447
        %1503 = vmatpush.msra.mxu0 %v1445
        %1504 = vmatpush.msra.mxu0 %v1443
        %1505 = vmatpush.msra.mxu0 %v1441
        %1506 = vmatpush.msra.mxu0 %v1439
        %1507 = vmatpush.msra.mxu0 %v1437
        %1508 = vmatpush.msra.mxu0 %v1435
        %1509 = vmatpush.msra.mxu0 %v1433
        %1510 = vmatpush.msra.mxu0 %v1431
        %1511 = vmatpush.msra.mxu0 %v1429
        %1512 = vmatpush.msra.mxu0 %v1427
        %1513 = vmatmul.f32.gmra.mxu0 %v1451
        %v1514 = vpop.f32.mrf.mxu0
        %v1515 = vadd.f32 0.0, %v1514
        %1516 = vmatmul.f32.gmra.mxu0 %v1454
        %v1517 = vpop.f32.mrf.mxu0
        %v1518 = vadd.f32 0.0, %v1517
        %1519 = vmatmul.f32.gmra.mxu0 %v1457
        %v1520 = vpop.f32.mrf.mxu0
        %v1521 = vadd.f32 0.0, %v1520
        %1522 = vmatmul.f32.gmra.mxu0 %v1460
        %v1523 = vpop.f32.mrf.mxu0
        %v1524 = vadd.f32 0.0, %v1523
        %1525 = vmatmul.f32.gmra.mxu0 %v1463
        %v1526 = vpop.f32.mrf.mxu0
        %v1527 = vadd.f32 0.0, %v1526
        %1528 = vdwg.mxu0
        %v1529 = vadd.f32 %v1374, %v1483
        %v1530 = vadd.f32 %v1406, %v1515
        %v1531 = vadd.f32 %v1377, %v1486
        %v1532 = vadd.f32 %v1409, %v1518
        %v1533 = vadd.f32 %v1380, %v1489
        %v1534 = vadd.f32 %v1412, %v1521
        %v1535 = vadd.f32 %v1383, %v1492
        %v1536 = vadd.f32 %v1415, %v1524
        %v1537 = vadd.f32 %v1386, %v1495
        %v1538 = vadd.f32 %v1418, %v1527
        %v1539 = vld [vmem:[%s1196] sm:$0xff]
        %v1540 = vld [vmem:[%s1196 + $0x8] sm:$0xff]
        %v1541 = vld [vmem:[%s1196 + $0x10] sm:$0xff]
        %v1542 = vld [vmem:[%s1196 + $0x18] sm:$0xff]
        %v1543 = vld [vmem:[%s1196 + $0x20] sm:$0xff]
        %s1544 = scalar_lea.vmem %s3, 576
        %v1545 = vld [vmem:[%s1544] sm:$0xff]
        %v1546 = vld [vmem:[%s1544 + $0x8] sm:$0xff]
        %v1547 = vld [vmem:[%s1544 + $0x10] sm:$0xff]
        %v1548 = vld [vmem:[%s1544 + $0x18] sm:$0xff]
        %v1549 = vld [vmem:[%s1544 + $0x20] sm:$0xff]
        %v1550 = vld [vmem:[%s1544 + $0x28] sm:$0xff]
        %v1551 = vld [vmem:[%s1544 + $0x30] sm:$0xff]
        %v1552 = vld [vmem:[%s1544 + $0x38] sm:$0xff]
        %v1553 = vld [vmem:[%s1544 + $0x40] sm:$0xff]
        %v1554 = vld [vmem:[%s1544 + $0x48] sm:$0xff]
        %v1555 = vld [vmem:[%s1544 + $0x50] sm:$0xff]
        %v1556 = vld [vmem:[%s1544 + $0x58] sm:$0xff]
        %v1557 = vld [vmem:[%s1544 + $0x60] sm:$0xff]
        %v1558 = vld [vmem:[%s1544 + $0x68] sm:$0xff]
        %v1559 = vld [vmem:[%s1544 + $0x70] sm:$0xff]
        %v1560 = vld [vmem:[%s1544 + $0x78] sm:$0xff]
        %v1561 = vld [vmem:[%s1544 + $0x80] sm:$0xff]
        %v1562 = vld [vmem:[%s1544 + $0x88] sm:$0xff]
        %v1563 = vld [vmem:[%s1544 + $0x90] sm:$0xff]
        %v1564 = vld [vmem:[%s1544 + $0x98] sm:$0xff]
        %v1565 = vld [vmem:[%s1544 + $0xa0] sm:$0xff]
        %v1566 = vld [vmem:[%s1544 + $0xa8] sm:$0xff]
        %v1567 = vld [vmem:[%s1544 + $0xb0] sm:$0xff]
        %v1568 = vld [vmem:[%s1544 + $0xb8] sm:$0xff]
        %v1570 = vsel %vm1049, %v1539, 0
        %v1573 = vsel %vm1049, %v1540, 0
        %v1576 = vsel %vm1049, %v1541, 0
        %v1579 = vsel %vm1049, %v1542, 0
        %v1582 = vsel %vm1049, %v1543, 0
        %1584 = vmatpush.msra.mxu0 0.0
        %1585 = vmatpush.msra.mxu0 0.0
        %1586 = vmatpush.msra.mxu0 0.0
        %1587 = vmatpush.msra.mxu0 0.0
        %1588 = vmatpush.msra.mxu0 %v1567
        %1589 = vmatpush.msra.mxu0 %v1565
        %1590 = vmatpush.msra.mxu0 %v1563
        %1591 = vmatpush.msra.mxu0 %v1561
        %1592 = vmatpush.msra.mxu0 %v1559
        %1593 = vmatpush.msra.mxu0 %v1557
        %1594 = vmatpush.msra.mxu0 %v1555
        %1595 = vmatpush.msra.mxu0 %v1553
        %1596 = vmatpush.msra.mxu0 %v1551
        %1597 = vmatpush.msra.mxu0 %v1549
        %1598 = vmatpush.msra.mxu0 %v1547
        %1599 = vmatpush.msra.mxu0 %v1545
        %1600 = vmatmul.f32.gmra.mxu0 %v1570
        %v1601 = vpop.f32.mrf.mxu0
        %v1602 = vadd.f32 0.0, %v1601
        %1603 = vmatmul.f32.gmra.mxu0 %v1573
        %v1604 = vpop.f32.mrf.mxu0
        %v1605 = vadd.f32 0.0, %v1604
        %1606 = vmatmul.f32.gmra.mxu0 %v1576
        %v1607 = vpop.f32.mrf.mxu0
        %v1608 = vadd.f32 0.0, %v1607
        %1609 = vmatmul.f32.gmra.mxu0 %v1579
        %v1610 = vpop.f32.mrf.mxu0
        %v1611 = vadd.f32 0.0, %v1610
        %1612 = vmatmul.f32.gmra.mxu0 %v1582
        %v1613 = vpop.f32.mrf.mxu0
        %v1614 = vadd.f32 0.0, %v1613
        %1615 = vdwg.mxu0
        %1616 = vmatpush.msra.mxu0 0.0
        %1617 = vmatpush.msra.mxu0 0.0
        %1618 = vmatpush.msra.mxu0 0.0
        %1619 = vmatpush.msra.mxu0 0.0
        %1620 = vmatpush.msra.mxu0 %v1568
        %1621 = vmatpush.msra.mxu0 %v1566
        %1622 = vmatpush.msra.mxu0 %v1564
        %1623 = vmatpush.msra.mxu0 %v1562
        %1624 = vmatpush.msra.mxu0 %v1560
        %1625 = vmatpush.msra.mxu0 %v1558
        %1626 = vmatpush.msra.mxu0 %v1556
        %1627 = vmatpush.msra.mxu0 %v1554
        %1628 = vmatpush.msra.mxu0 %v1552
        %1629 = vmatpush.msra.mxu0 %v1550
        %1630 = vmatpush.msra.mxu0 %v1548
        %1631 = vmatpush.msra.mxu0 %v1546
        %1632 = vmatmul.f32.gmra.mxu0 %v1570
        %v1633 = vpop.f32.mrf.mxu0
        %v1634 = vadd.f32 0.0, %v1633
        %1635 = vmatmul.f32.gmra.mxu0 %v1573
        %v1636 = vpop.f32.mrf.mxu0
        %v1637 = vadd.f32 0.0, %v1636
        %1638 = vmatmul.f32.gmra.mxu0 %v1576
        %v1639 = vpop.f32.mrf.mxu0
        %v1640 = vadd.f32 0.0, %v1639
        %1641 = vmatmul.f32.gmra.mxu0 %v1579
        %v1642 = vpop.f32.mrf.mxu0
        %v1643 = vadd.f32 0.0, %v1642
        %1644 = vmatmul.f32.gmra.mxu0 %v1582
        %v1645 = vpop.f32.mrf.mxu0
        %v1646 = vadd.f32 0.0, %v1645
        %1647 = vdwg.mxu0
        %v1648 = vadd.f32 %v1529, %v1602
        %v1649 = vadd.f32 %v1530, %v1634
        %v1650 = vadd.f32 %v1531, %v1605
        %v1651 = vadd.f32 %v1532, %v1637
        %v1652 = vadd.f32 %v1533, %v1608
        %v1653 = vadd.f32 %v1534, %v1640
        %v1654 = vadd.f32 %v1535, %v1611
        %v1655 = vadd.f32 %v1536, %v1643
        %v1656 = vadd.f32 %v1537, %v1614
        %v1657 = vadd.f32 %v1538, %v1646
        %v1658 = vld [vmem:[#allocation3 + $0x8] sm:$0xff]
        %v1659 = vld [vmem:[#allocation3 + $0x10] sm:$0xff]
        %v1660 = vld [vmem:[#allocation3 + $0x18] sm:$0xff]
        %v1661 = vld [vmem:[#allocation3 + $0x20] sm:$0xff]
        %v1662 = vld [vmem:[#allocation3 + $0x28] sm:$0xff]
        %s1663 = scalar_lea.vmem %s3, 768
        %v1664 = vld [vmem:[%s1663] sm:$0xff]
        %v1665 = vld [vmem:[%s1663 + $0x8] sm:$0xff]
        %v1666 = vld [vmem:[%s1663 + $0x10] sm:$0xff]
        %v1667 = vld [vmem:[%s1663 + $0x18] sm:$0xff]
        %v1668 = vld [vmem:[%s1663 + $0x20] sm:$0xff]
        %v1669 = vld [vmem:[%s1663 + $0x28] sm:$0xff]
        %v1670 = vld [vmem:[%s1663 + $0x30] sm:$0xff]
        %v1671 = vld [vmem:[%s1663 + $0x38] sm:$0xff]
        %v1672 = vld [vmem:[%s1663 + $0x40] sm:$0xff]
        %v1673 = vld [vmem:[%s1663 + $0x48] sm:$0xff]
        %v1674 = vld [vmem:[%s1663 + $0x50] sm:$0xff]
        %v1675 = vld [vmem:[%s1663 + $0x58] sm:$0xff]
        %v1676 = vld [vmem:[%s1663 + $0x60] sm:$0xff]
        %v1677 = vld [vmem:[%s1663 + $0x68] sm:$0xff]
        %v1678 = vld [vmem:[%s1663 + $0x70] sm:$0xff]
        %v1679 = vld [vmem:[%s1663 + $0x78] sm:$0xff]
        %v1680 = vld [vmem:[%s1663 + $0x80] sm:$0xff]
        %v1681 = vld [vmem:[%s1663 + $0x88] sm:$0xff]
        %v1682 = vld [vmem:[%s1663 + $0x90] sm:$0xff]
        %v1683 = vld [vmem:[%s1663 + $0x98] sm:$0xff]
        %v1684 = vld [vmem:[%s1663 + $0xa0] sm:$0xff]
        %v1685 = vld [vmem:[%s1663 + $0xa8] sm:$0xff]
        %v1686 = vld [vmem:[%s1663 + $0xb0] sm:$0xff]
        %v1687 = vld [vmem:[%s1663 + $0xb8] sm:$0xff]
        %v1689 = vsel %vm1049, %v1658, 0
        %v1692 = vsel %vm1049, %v1659, 0
        %v1695 = vsel %vm1049, %v1660, 0
        %v1698 = vsel %vm1049, %v1661, 0
        %v1701 = vsel %vm1049, %v1662, 0
        %1703 = vmatpush.msra.mxu0 0.0
        %1704 = vmatpush.msra.mxu0 0.0
        %1705 = vmatpush.msra.mxu0 0.0
        %1706 = vmatpush.msra.mxu0 0.0
        %1707 = vmatpush.msra.mxu0 %v1686
        %1708 = vmatpush.msra.mxu0 %v1684
        %1709 = vmatpush.msra.mxu0 %v1682
        %1710 = vmatpush.msra.mxu0 %v1680
        %1711 = vmatpush.msra.mxu0 %v1678
        %1712 = vmatpush.msra.mxu0 %v1676
        %1713 = vmatpush.msra.mxu0 %v1674
        %1714 = vmatpush.msra.mxu0 %v1672
        %1715 = vmatpush.msra.mxu0 %v1670
        %1716 = vmatpush.msra.mxu0 %v1668
        %1717 = vmatpush.msra.mxu0 %v1666
        %1718 = vmatpush.msra.mxu0 %v1664
        %1719 = vmatmul.f32.gmra.mxu0 %v1689
        %v1720 = vpop.f32.mrf.mxu0
        %v1721 = vadd.f32 0.0, %v1720
        %1722 = vmatmul.f32.gmra.mxu0 %v1692
        %v1723 = vpop.f32.mrf.mxu0
        %v1724 = vadd.f32 0.0, %v1723
        %1725 = vmatmul.f32.gmra.mxu0 %v1695
        %v1726 = vpop.f32.mrf.mxu0
        %v1727 = vadd.f32 0.0, %v1726
        %1728 = vmatmul.f32.gmra.mxu0 %v1698
        %v1729 = vpop.f32.mrf.mxu0
        %v1730 = vadd.f32 0.0, %v1729
        %1731 = vmatmul.f32.gmra.mxu0 %v1701
        %v1732 = vpop.f32.mrf.mxu0
        %v1733 = vadd.f32 0.0, %v1732
        %1734 = vdwg.mxu0
        %1735 = vmatpush.msra.mxu0 0.0
        %1736 = vmatpush.msra.mxu0 0.0
        %1737 = vmatpush.msra.mxu0 0.0
        %1738 = vmatpush.msra.mxu0 0.0
        %1739 = vmatpush.msra.mxu0 %v1687
        %1740 = vmatpush.msra.mxu0 %v1685
        %1741 = vmatpush.msra.mxu0 %v1683
        %1742 = vmatpush.msra.mxu0 %v1681
        %1743 = vmatpush.msra.mxu0 %v1679
        %1744 = vmatpush.msra.mxu0 %v1677
        %1745 = vmatpush.msra.mxu0 %v1675
        %1746 = vmatpush.msra.mxu0 %v1673
        %1747 = vmatpush.msra.mxu0 %v1671
        %1748 = vmatpush.msra.mxu0 %v1669
        %1749 = vmatpush.msra.mxu0 %v1667
        %1750 = vmatpush.msra.mxu0 %v1665
        %1751 = vmatmul.f32.gmra.mxu0 %v1689
        %v1752 = vpop.f32.mrf.mxu0
        %v1753 = vadd.f32 0.0, %v1752
        %1754 = vmatmul.f32.gmra.mxu0 %v1692
        %v1755 = vpop.f32.mrf.mxu0
        %v1756 = vadd.f32 0.0, %v1755
        %1757 = vmatmul.f32.gmra.mxu0 %v1695
        %v1758 = vpop.f32.mrf.mxu0
        %v1759 = vadd.f32 0.0, %v1758
        %1760 = vmatmul.f32.gmra.mxu0 %v1698
        %v1761 = vpop.f32.mrf.mxu0
        %v1762 = vadd.f32 0.0, %v1761
        %1763 = vmatmul.f32.gmra.mxu0 %v1701
        %v1764 = vpop.f32.mrf.mxu0
        %v1765 = vadd.f32 0.0, %v1764
        %1766 = vdwg.mxu0
        %v1767 = vadd.f32 %v1648, %v1721
        %v1768 = vadd.f32 %v1649, %v1753
        %v1769 = vadd.f32 %v1650, %v1724
        %v1770 = vadd.f32 %v1651, %v1756
        %v1771 = vadd.f32 %v1652, %v1727
        %v1772 = vadd.f32 %v1653, %v1759
        %v1773 = vadd.f32 %v1654, %v1730
        %v1774 = vadd.f32 %v1655, %v1762
        %v1775 = vadd.f32 %v1656, %v1733
        %v1776 = vadd.f32 %v1657, %v1765
        %v1777 = vld [vmem:[%s1116 + $0x8] sm:$0xff]
        %v1778 = vld [vmem:[%s1116 + $0x10] sm:$0xff]
        %v1779 = vld [vmem:[%s1116 + $0x18] sm:$0xff]
        %v1780 = vld [vmem:[%s1116 + $0x20] sm:$0xff]
        %v1781 = vld [vmem:[%s1116 + $0x28] sm:$0xff]
        %s1782 = scalar_lea.vmem %s3, 960
        %v1783 = vld [vmem:[%s1782] sm:$0xff]
        %v1784 = vld [vmem:[%s1782 + $0x8] sm:$0xff]
        %v1785 = vld [vmem:[%s1782 + $0x10] sm:$0xff]
        %v1786 = vld [vmem:[%s1782 + $0x18] sm:$0xff]
        %v1787 = vld [vmem:[%s1782 + $0x20] sm:$0xff]
        %v1788 = vld [vmem:[%s1782 + $0x28] sm:$0xff]
        %v1789 = vld [vmem:[%s1782 + $0x30] sm:$0xff]
        %v1790 = vld [vmem:[%s1782 + $0x38] sm:$0xff]
        %v1791 = vld [vmem:[%s1782 + $0x40] sm:$0xff]
        %v1792 = vld [vmem:[%s1782 + $0x48] sm:$0xff]
        %v1793 = vld [vmem:[%s1782 + $0x50] sm:$0xff]
        %v1794 = vld [vmem:[%s1782 + $0x58] sm:$0xff]
        %v1795 = vld [vmem:[%s1782 + $0x60] sm:$0xff]
        %v1796 = vld [vmem:[%s1782 + $0x68] sm:$0xff]
        %v1797 = vld [vmem:[%s1782 + $0x70] sm:$0xff]
        %v1798 = vld [vmem:[%s1782 + $0x78] sm:$0xff]
        %v1799 = vld [vmem:[%s1782 + $0x80] sm:$0xff]
        %v1800 = vld [vmem:[%s1782 + $0x88] sm:$0xff]
        %v1801 = vld [vmem:[%s1782 + $0x90] sm:$0xff]
        %v1802 = vld [vmem:[%s1782 + $0x98] sm:$0xff]
        %v1803 = vld [vmem:[%s1782 + $0xa0] sm:$0xff]
        %v1804 = vld [vmem:[%s1782 + $0xa8] sm:$0xff]
        %v1805 = vld [vmem:[%s1782 + $0xb0] sm:$0xff]
        %v1806 = vld [vmem:[%s1782 + $0xb8] sm:$0xff]
        %v1808 = vsel %vm1049, %v1777, 0
        %v1811 = vsel %vm1049, %v1778, 0
        %v1814 = vsel %vm1049, %v1779, 0
        %v1817 = vsel %vm1049, %v1780, 0
        %v1820 = vsel %vm1049, %v1781, 0
        %1822 = vmatpush.msra.mxu0 0.0
        %1823 = vmatpush.msra.mxu0 0.0
        %1824 = vmatpush.msra.mxu0 0.0
        %1825 = vmatpush.msra.mxu0 0.0
        %1826 = vmatpush.msra.mxu0 %v1805
        %1827 = vmatpush.msra.mxu0 %v1803
        %1828 = vmatpush.msra.mxu0 %v1801
        %1829 = vmatpush.msra.mxu0 %v1799
        %1830 = vmatpush.msra.mxu0 %v1797
        %1831 = vmatpush.msra.mxu0 %v1795
        %1832 = vmatpush.msra.mxu0 %v1793
        %1833 = vmatpush.msra.mxu0 %v1791
        %1834 = vmatpush.msra.mxu0 %v1789
        %1835 = vmatpush.msra.mxu0 %v1787
        %1836 = vmatpush.msra.mxu0 %v1785
        %1837 = vmatpush.msra.mxu0 %v1783
        %1838 = vmatmul.f32.gmra.mxu0 %v1808
        %v1839 = vpop.f32.mrf.mxu0
        %v1840 = vadd.f32 0.0, %v1839
        %1841 = vmatmul.f32.gmra.mxu0 %v1811
        %v1842 = vpop.f32.mrf.mxu0
        %v1843 = vadd.f32 0.0, %v1842
        %1844 = vmatmul.f32.gmra.mxu0 %v1814
        %v1845 = vpop.f32.mrf.mxu0
        %v1846 = vadd.f32 0.0, %v1845
        %1847 = vmatmul.f32.gmra.mxu0 %v1817
        %v1848 = vpop.f32.mrf.mxu0
        %v1849 = vadd.f32 0.0, %v1848
        %1850 = vmatmul.f32.gmra.mxu0 %v1820
        %v1851 = vpop.f32.mrf.mxu0
        %v1852 = vadd.f32 0.0, %v1851
        %1853 = vdwg.mxu0
        %1854 = vmatpush.msra.mxu0 0.0
        %1855 = vmatpush.msra.mxu0 0.0
        %1856 = vmatpush.msra.mxu0 0.0
        %1857 = vmatpush.msra.mxu0 0.0
        %1858 = vmatpush.msra.mxu0 %v1806
        %1859 = vmatpush.msra.mxu0 %v1804
        %1860 = vmatpush.msra.mxu0 %v1802
        %1861 = vmatpush.msra.mxu0 %v1800
        %1862 = vmatpush.msra.mxu0 %v1798
        %1863 = vmatpush.msra.mxu0 %v1796
        %1864 = vmatpush.msra.mxu0 %v1794
        %1865 = vmatpush.msra.mxu0 %v1792
        %1866 = vmatpush.msra.mxu0 %v1790
        %1867 = vmatpush.msra.mxu0 %v1788
        %1868 = vmatpush.msra.mxu0 %v1786
        %1869 = vmatpush.msra.mxu0 %v1784
        %1870 = vmatmul.f32.gmra.mxu0 %v1808
        %v1871 = vpop.f32.mrf.mxu0
        %v1872 = vadd.f32 0.0, %v1871
        %1873 = vmatmul.f32.gmra.mxu0 %v1811
        %v1874 = vpop.f32.mrf.mxu0
        %v1875 = vadd.f32 0.0, %v1874
        %1876 = vmatmul.f32.gmra.mxu0 %v1814
        %v1877 = vpop.f32.mrf.mxu0
        %v1878 = vadd.f32 0.0, %v1877
        %1879 = vmatmul.f32.gmra.mxu0 %v1817
        %v1880 = vpop.f32.mrf.mxu0
        %v1881 = vadd.f32 0.0, %v1880
        %1882 = vmatmul.f32.gmra.mxu0 %v1820
        %v1883 = vpop.f32.mrf.mxu0
        %v1884 = vadd.f32 0.0, %v1883
        %1885 = vdwg.mxu0
        %v1886 = vadd.f32 %v1767, %v1840
        %v1887 = vadd.f32 %v1768, %v1872
        %v1888 = vadd.f32 %v1769, %v1843
        %v1889 = vadd.f32 %v1770, %v1875
        %v1890 = vadd.f32 %v1771, %v1846
        %v1891 = vadd.f32 %v1772, %v1878
        %v1892 = vadd.f32 %v1773, %v1849
        %v1893 = vadd.f32 %v1774, %v1881
        %v1894 = vadd.f32 %v1775, %v1852
        %v1895 = vadd.f32 %v1776, %v1884
        %v1896 = vld [vmem:[%s1129 + $0x8] sm:$0xff]
        %v1897 = vld [vmem:[%s1129 + $0x10] sm:$0xff]
        %v1898 = vld [vmem:[%s1129 + $0x18] sm:$0xff]
        %v1899 = vld [vmem:[%s1129 + $0x20] sm:$0xff]
        %v1900 = vld [vmem:[%s1129 + $0x28] sm:$0xff]
        %s1901 = scalar_lea.vmem %s3, 1152
        %v1902 = vld [vmem:[%s1901] sm:$0xff]
        %v1903 = vld [vmem:[%s1901 + $0x8] sm:$0xff]
        %v1904 = vld [vmem:[%s1901 + $0x10] sm:$0xff]
        %v1905 = vld [vmem:[%s1901 + $0x18] sm:$0xff]
        %v1906 = vld [vmem:[%s1901 + $0x20] sm:$0xff]
        %v1907 = vld [vmem:[%s1901 + $0x28] sm:$0xff]
        %v1908 = vld [vmem:[%s1901 + $0x30] sm:$0xff]
        %v1909 = vld [vmem:[%s1901 + $0x38] sm:$0xff]
        %v1910 = vld [vmem:[%s1901 + $0x40] sm:$0xff]
        %v1911 = vld [vmem:[%s1901 + $0x48] sm:$0xff]
        %v1912 = vld [vmem:[%s1901 + $0x50] sm:$0xff]
        %v1913 = vld [vmem:[%s1901 + $0x58] sm:$0xff]
        %v1914 = vld [vmem:[%s1901 + $0x60] sm:$0xff]
        %v1915 = vld [vmem:[%s1901 + $0x68] sm:$0xff]
        %v1916 = vld [vmem:[%s1901 + $0x70] sm:$0xff]
        %v1917 = vld [vmem:[%s1901 + $0x78] sm:$0xff]
        %v1918 = vld [vmem:[%s1901 + $0x80] sm:$0xff]
        %v1919 = vld [vmem:[%s1901 + $0x88] sm:$0xff]
        %v1920 = vld [vmem:[%s1901 + $0x90] sm:$0xff]
        %v1921 = vld [vmem:[%s1901 + $0x98] sm:$0xff]
        %v1922 = vld [vmem:[%s1901 + $0xa0] sm:$0xff]
        %v1923 = vld [vmem:[%s1901 + $0xa8] sm:$0xff]
        %v1924 = vld [vmem:[%s1901 + $0xb0] sm:$0xff]
        %v1925 = vld [vmem:[%s1901 + $0xb8] sm:$0xff]
        %v1927 = vsel %vm1049, %v1896, 0
        %v1930 = vsel %vm1049, %v1897, 0
        %v1933 = vsel %vm1049, %v1898, 0
        %v1936 = vsel %vm1049, %v1899, 0
        %v1939 = vsel %vm1049, %v1900, 0
        %1941 = vmatpush.msra.mxu0 0.0
        %1942 = vmatpush.msra.mxu0 0.0
        %1943 = vmatpush.msra.mxu0 0.0
        %1944 = vmatpush.msra.mxu0 0.0
        %1945 = vmatpush.msra.mxu0 %v1924
        %1946 = vmatpush.msra.mxu0 %v1922
        %1947 = vmatpush.msra.mxu0 %v1920
        %1948 = vmatpush.msra.mxu0 %v1918
        %1949 = vmatpush.msra.mxu0 %v1916
        %1950 = vmatpush.msra.mxu0 %v1914
        %1951 = vmatpush.msra.mxu0 %v1912
        %1952 = vmatpush.msra.mxu0 %v1910
        %1953 = vmatpush.msra.mxu0 %v1908
        %1954 = vmatpush.msra.mxu0 %v1906
        %1955 = vmatpush.msra.mxu0 %v1904
        %1956 = vmatpush.msra.mxu0 %v1902
        %1957 = vmatmul.f32.gmra.mxu0 %v1927
        %v1958 = vpop.f32.mrf.mxu0
        %v1959 = vadd.f32 0.0, %v1958
        %1960 = vmatmul.f32.gmra.mxu0 %v1930
        %v1961 = vpop.f32.mrf.mxu0
        %v1962 = vadd.f32 0.0, %v1961
        %1963 = vmatmul.f32.gmra.mxu0 %v1933
        %v1964 = vpop.f32.mrf.mxu0
        %v1965 = vadd.f32 0.0, %v1964
        %1966 = vmatmul.f32.gmra.mxu0 %v1936
        %v1967 = vpop.f32.mrf.mxu0
        %v1968 = vadd.f32 0.0, %v1967
        %1969 = vmatmul.f32.gmra.mxu0 %v1939
        %v1970 = vpop.f32.mrf.mxu0
        %v1971 = vadd.f32 0.0, %v1970
        %1972 = vdwg.mxu0
        %1973 = vmatpush.msra.mxu0 0.0
        %1974 = vmatpush.msra.mxu0 0.0
        %1975 = vmatpush.msra.mxu0 0.0
        %1976 = vmatpush.msra.mxu0 0.0
        %1977 = vmatpush.msra.mxu0 %v1925
        %1978 = vmatpush.msra.mxu0 %v1923
        %1979 = vmatpush.msra.mxu0 %v1921
        %1980 = vmatpush.msra.mxu0 %v1919
        %1981 = vmatpush.msra.mxu0 %v1917
        %1982 = vmatpush.msra.mxu0 %v1915
        %1983 = vmatpush.msra.mxu0 %v1913
        %1984 = vmatpush.msra.mxu0 %v1911
        %1985 = vmatpush.msra.mxu0 %v1909
        %1986 = vmatpush.msra.mxu0 %v1907
        %1987 = vmatpush.msra.mxu0 %v1905
        %1988 = vmatpush.msra.mxu0 %v1903
        %1989 = vmatmul.f32.gmra.mxu0 %v1927
        %v1990 = vpop.f32.mrf.mxu0
        %v1991 = vadd.f32 0.0, %v1990
        %1992 = vmatmul.f32.gmra.mxu0 %v1930
        %v1993 = vpop.f32.mrf.mxu0
        %v1994 = vadd.f32 0.0, %v1993
        %1995 = vmatmul.f32.gmra.mxu0 %v1933
        %v1996 = vpop.f32.mrf.mxu0
        %v1997 = vadd.f32 0.0, %v1996
        %1998 = vmatmul.f32.gmra.mxu0 %v1936
        %v1999 = vpop.f32.mrf.mxu0
        %v2000 = vadd.f32 0.0, %v1999
        %2001 = vmatmul.f32.gmra.mxu0 %v1939
        %v2002 = vpop.f32.mrf.mxu0
        %v2003 = vadd.f32 0.0, %v2002
        %2004 = vdwg.mxu0
        %v2005 = vadd.f32 %v1886, %v1959
        %v2006 = vadd.f32 %v1887, %v1991
        %v2007 = vadd.f32 %v1888, %v1962
        %v2008 = vadd.f32 %v1889, %v1994
        %v2009 = vadd.f32 %v1890, %v1965
        %v2010 = vadd.f32 %v1891, %v1997
        %v2011 = vadd.f32 %v1892, %v1968
        %v2012 = vadd.f32 %v1893, %v2000
        %v2013 = vadd.f32 %v1894, %v1971
        %v2014 = vadd.f32 %v1895, %v2003
        %v2015 = vld [vmem:[%s1196 + $0x8] sm:$0xff]
        %v2016 = vld [vmem:[%s1196 + $0x10] sm:$0xff]
        %v2017 = vld [vmem:[%s1196 + $0x18] sm:$0xff]
        %v2018 = vld [vmem:[%s1196 + $0x20] sm:$0xff]
        %v2019 = vld [vmem:[%s1196 + $0x28] sm:$0xff]
        %s2020 = scalar_lea.vmem %s3, 1344
        %v2021 = vld [vmem:[%s2020] sm:$0xff]
        %v2022 = vld [vmem:[%s2020 + $0x8] sm:$0xff]
        %v2023 = vld [vmem:[%s2020 + $0x10] sm:$0xff]
        %v2024 = vld [vmem:[%s2020 + $0x18] sm:$0xff]
        %v2025 = vld [vmem:[%s2020 + $0x20] sm:$0xff]
        %v2026 = vld [vmem:[%s2020 + $0x28] sm:$0xff]
        %v2027 = vld [vmem:[%s2020 + $0x30] sm:$0xff]
        %v2028 = vld [vmem:[%s2020 + $0x38] sm:$0xff]
        %v2029 = vld [vmem:[%s2020 + $0x40] sm:$0xff]
        %v2030 = vld [vmem:[%s2020 + $0x48] sm:$0xff]
        %v2031 = vld [vmem:[%s2020 + $0x50] sm:$0xff]
        %v2032 = vld [vmem:[%s2020 + $0x58] sm:$0xff]
        %v2033 = vld [vmem:[%s2020 + $0x60] sm:$0xff]
        %v2034 = vld [vmem:[%s2020 + $0x68] sm:$0xff]
        %v2035 = vld [vmem:[%s2020 + $0x70] sm:$0xff]
        %v2036 = vld [vmem:[%s2020 + $0x78] sm:$0xff]
        %v2037 = vld [vmem:[%s2020 + $0x80] sm:$0xff]
        %v2038 = vld [vmem:[%s2020 + $0x88] sm:$0xff]
        %v2039 = vld [vmem:[%s2020 + $0x90] sm:$0xff]
        %v2040 = vld [vmem:[%s2020 + $0x98] sm:$0xff]
        %v2041 = vld [vmem:[%s2020 + $0xa0] sm:$0xff]
        %v2042 = vld [vmem:[%s2020 + $0xa8] sm:$0xff]
        %v2043 = vld [vmem:[%s2020 + $0xb0] sm:$0xff]
        %v2044 = vld [vmem:[%s2020 + $0xb8] sm:$0xff]
        %v2046 = vsel %vm1049, %v2015, 0
        %v2049 = vsel %vm1049, %v2016, 0
        %v2052 = vsel %vm1049, %v2017, 0
        %v2055 = vsel %vm1049, %v2018, 0
        %v2058 = vsel %vm1049, %v2019, 0
        %2060 = vmatpush.msra.mxu0 0.0
        %2061 = vmatpush.msra.mxu0 0.0
        %2062 = vmatpush.msra.mxu0 0.0
        %2063 = vmatpush.msra.mxu0 0.0
        %2064 = vmatpush.msra.mxu0 %v2043
        %2065 = vmatpush.msra.mxu0 %v2041
        %2066 = vmatpush.msra.mxu0 %v2039
        %2067 = vmatpush.msra.mxu0 %v2037
        %2068 = vmatpush.msra.mxu0 %v2035
        %2069 = vmatpush.msra.mxu0 %v2033
        %2070 = vmatpush.msra.mxu0 %v2031
        %2071 = vmatpush.msra.mxu0 %v2029
        %2072 = vmatpush.msra.mxu0 %v2027
        %2073 = vmatpush.msra.mxu0 %v2025
        %2074 = vmatpush.msra.mxu0 %v2023
        %2075 = vmatpush.msra.mxu0 %v2021
        %2076 = vmatmul.f32.gmra.mxu0 %v2046
        %v2077 = vpop.f32.mrf.mxu0
        %v2078 = vadd.f32 0.0, %v2077
        %2079 = vmatmul.f32.gmra.mxu0 %v2049
        %v2080 = vpop.f32.mrf.mxu0
        %v2081 = vadd.f32 0.0, %v2080
        %2082 = vmatmul.f32.gmra.mxu0 %v2052
        %v2083 = vpop.f32.mrf.mxu0
        %v2084 = vadd.f32 0.0, %v2083
        %2085 = vmatmul.f32.gmra.mxu0 %v2055
        %v2086 = vpop.f32.mrf.mxu0
        %v2087 = vadd.f32 0.0, %v2086
        %2088 = vmatmul.f32.gmra.mxu0 %v2058
        %v2089 = vpop.f32.mrf.mxu0
        %v2090 = vadd.f32 0.0, %v2089
        %2091 = vdwg.mxu0
        %2092 = vmatpush.msra.mxu0 0.0
        %2093 = vmatpush.msra.mxu0 0.0
        %2094 = vmatpush.msra.mxu0 0.0
        %2095 = vmatpush.msra.mxu0 0.0
        %2096 = vmatpush.msra.mxu0 %v2044
        %2097 = vmatpush.msra.mxu0 %v2042
        %2098 = vmatpush.msra.mxu0 %v2040
        %2099 = vmatpush.msra.mxu0 %v2038
        %2100 = vmatpush.msra.mxu0 %v2036
        %2101 = vmatpush.msra.mxu0 %v2034
        %2102 = vmatpush.msra.mxu0 %v2032
        %2103 = vmatpush.msra.mxu0 %v2030
        %2104 = vmatpush.msra.mxu0 %v2028
        %2105 = vmatpush.msra.mxu0 %v2026
        %2106 = vmatpush.msra.mxu0 %v2024
        %2107 = vmatpush.msra.mxu0 %v2022
        %2108 = vmatmul.f32.gmra.mxu0 %v2046
        %v2109 = vpop.f32.mrf.mxu0
        %v2110 = vadd.f32 0.0, %v2109
        %2111 = vmatmul.f32.gmra.mxu0 %v2049
        %v2112 = vpop.f32.mrf.mxu0
        %v2113 = vadd.f32 0.0, %v2112
        %2114 = vmatmul.f32.gmra.mxu0 %v2052
        %v2115 = vpop.f32.mrf.mxu0
        %v2116 = vadd.f32 0.0, %v2115
        %2117 = vmatmul.f32.gmra.mxu0 %v2055
        %v2118 = vpop.f32.mrf.mxu0
        %v2119 = vadd.f32 0.0, %v2118
        %2120 = vmatmul.f32.gmra.mxu0 %v2058
        %v2121 = vpop.f32.mrf.mxu0
        %v2122 = vadd.f32 0.0, %v2121
        %2123 = vdwg.mxu0
        %v2124 = vadd.f32 %v2005, %v2078
        %v2125 = vadd.f32 %v2006, %v2110
        %v2126 = vadd.f32 %v2007, %v2081
        %v2127 = vadd.f32 %v2008, %v2113
        %v2128 = vadd.f32 %v2009, %v2084
        %v2129 = vadd.f32 %v2010, %v2116
        %v2130 = vadd.f32 %v2011, %v2087
        %v2131 = vadd.f32 %v2012, %v2119
        %v2132 = vadd.f32 %v2013, %v2090
        %v2133 = vadd.f32 %v2014, %v2122
        %v2134 = vld [vmem:[%s4] sm:$0x3]
        %v2136 = vperm.slane %v2134, 0
        %v2137 = vperm.slane %v2134, 1
        %v2140 = vadd.f32 %v2124, %v2136
        %v2141 = vadd.f32 %v2125, %v2137
        %v2142 = vadd.f32 %v2126, %v2136
        %v2143 = vadd.f32 %v2127, %v2137
        %v2144 = vadd.f32 %v2128, %v2136
        %v2145 = vadd.f32 %v2129, %v2137
        %v2146 = vadd.f32 %v2130, %v2136
        %v2147 = vadd.f32 %v2131, %v2137
        %v2148 = vadd.f32 %v2132, %v2136
        %v2149 = vadd.f32 %v2133, %v2137
        %v2150 = vmax.f32 %v2140, 0.0
        %v2151 = vmax.f32 %v2141, 0.0
        %v2152 = vmax.f32 %v2142, 0.0
        %v2153 = vmax.f32 %v2143, 0.0
        %v2154 = vmax.f32 %v2144, 0.0
        %v2155 = vmax.f32 %v2145, 0.0
        %v2156 = vmax.f32 %v2146, 0.0
        %v2157 = vmax.f32 %v2147, 0.0
        %v2158 = vmax.f32 %v2148, 0.0
        %v2159 = vmax.f32 %v2149, 0.0
        %2170 = vrot.lane.b32.xlu0 %v2150, 96
        %v2171 = vpop.permute.xlu0 %2170
        %2172 = vrot.lane.b32.xlu0 %v2151, 96
        %v2173 = vpop.permute.xlu0 %2172
        %2174 = vrot.lane.b32.xlu0 %v2152, 96
        %v2175 = vpop.permute.xlu0 %2174
        %2176 = vrot.lane.b32.xlu0 %v2153, 96
        %v2177 = vpop.permute.xlu0 %2176
        %2178 = vrot.lane.b32.xlu0 %v2154, 96
        %v2179 = vpop.permute.xlu0 %2178
        %2180 = vrot.lane.b32.xlu0 %v2155, 96
        %v2181 = vpop.permute.xlu0 %2180
        %2182 = vrot.lane.b32.xlu0 %v2156, 96
        %v2183 = vpop.permute.xlu0 %2182
        %2184 = vrot.lane.b32.xlu0 %v2157, 96
        %v2185 = vpop.permute.xlu0 %2184
        %2186 = vrot.lane.b32.xlu0 %v2158, 96
        %v2187 = vpop.permute.xlu0 %2186
        %2188 = vrot.lane.b32.xlu0 %v2159, 96
        %v2189 = vpop.permute.xlu0 %2188
        %v2190 = vsel %vm1049, %v2171, %v2173
        %v2191 = vsel %vm1049, %v2175, %v2177
        %v2192 = vsel %vm1049, %v2179, %v2181
        %v2193 = vsel %vm1049, %v2183, %v2185
        %v2194 = vsel %vm1049, %v2187, %v2189
        %v2200 = vmax.f32 %v2150, %v2190
        %v2201 = vmax.f32 %v2152, %v2191
        %v2202 = vmax.f32 %v2154, %v2192
        %v2203 = vmax.f32 %v2156, %v2193
        %v2204 = vmax.f32 %v2158, %v2194
        %v2205 = vmax.f32 %v2200, %v2201
        %v2206 = vmax.f32 %v2201, %v2202
        %v2207 = vmax.f32 %v2202, %v2203
        %v2208 = vmax.f32 %v2203, %v2204
        %v2209 = vld [vmem:[%s5] sm:$0xff]
        %v2210 = vld [vmem:[%s5 + $0x8] sm:$0xff]
        %v2211 = vld [vmem:[%s5 + $0x10] sm:$0xff]
        %v2212 = vld [vmem:[%s5 + $0x18] sm:$0xff]
        %v2213 = vld [vmem:[%s5 + $0x20] sm:$0xff]
        %v2214 = vld [vmem:[%s5 + $0x28] sm:$0xff]
        %v2215 = vld [vmem:[%s5 + $0x30] sm:$0xff]
        %v2216 = vld [vmem:[%s5 + $0x38] sm:$0xff]
        %v2217 = vld [vmem:[%s5 + $0x40] sm:$0xff]
        %v2218 = vld [vmem:[%s5 + $0x48] sm:$0xff]
        %v2219 = vld [vmem:[%s5 + $0x50] sm:$0xff]
        %v2220 = vld [vmem:[%s5 + $0x58] sm:$0xff]
        %v2221 = vld [vmem:[%s5 + $0x60] sm:$0xff]
        %v2222 = vld [vmem:[%s5 + $0x68] sm:$0xff]
        %v2223 = vld [vmem:[%s5 + $0x70] sm:$0xff]
        %v2224 = vld [vmem:[%s5 + $0x78] sm:$0xff]
        %s2225 = scalar_lea.vmem %s5, 128
        %v2226 = vld [vmem:[%s2225] sm:$0xff]
        %v2227 = vld [vmem:[%s2225 + $0x8] sm:$0xff]
        %v2228 = vld [vmem:[%s2225 + $0x10] sm:$0xff]
        %v2229 = vld [vmem:[%s2225 + $0x18] sm:$0xff]
        %v2230 = vld [vmem:[%s2225 + $0x20] sm:$0xff]
        %v2231 = vld [vmem:[%s2225 + $0x28] sm:$0xff]
        %v2232 = vld [vmem:[%s2225 + $0x30] sm:$0xff]
        %v2233 = vld [vmem:[%s2225 + $0x38] sm:$0xff]
        %v2234 = vld [vmem:[%s2225 + $0x40] sm:$0xff]
        %v2235 = vld [vmem:[%s2225 + $0x48] sm:$0xff]
        %v2236 = vld [vmem:[%s2225 + $0x50] sm:$0xff]
        %v2237 = vld [vmem:[%s2225 + $0x58] sm:$0xff]
        %v2238 = vld [vmem:[%s2225 + $0x60] sm:$0xff]
        %v2239 = vld [vmem:[%s2225 + $0x68] sm:$0xff]
        %v2240 = vld [vmem:[%s2225 + $0x70] sm:$0xff]
        %v2241 = vld [vmem:[%s2225 + $0x78] sm:$0xff]
        %2242 = vmatpush.msra.mxu0 %v2241
        %2243 = vmatpush.msra.mxu0 %v2240
        %2244 = vmatpush.msra.mxu0 %v2239
        %2245 = vmatpush.msra.mxu0 %v2238
        %2246 = vmatpush.msra.mxu0 %v2237
        %2247 = vmatpush.msra.mxu0 %v2236
        %2248 = vmatpush.msra.mxu0 %v2235
        %2249 = vmatpush.msra.mxu0 %v2234
        %2250 = vmatpush.msra.mxu0 %v2233
        %2251 = vmatpush.msra.mxu0 %v2232
        %2252 = vmatpush.msra.mxu0 %v2231
        %2253 = vmatpush.msra.mxu0 %v2230
        %2254 = vmatpush.msra.mxu0 %v2229
        %2255 = vmatpush.msra.mxu0 %v2228
        %2256 = vmatpush.msra.mxu0 %v2227
        %2257 = vmatpush.msra.mxu0 %v2226
        %2258 = vmatmul.f32.gmra.mxu0 %v2206
        %v2259 = vpop.f32.mrf.mxu0
        %v2260 = vadd.f32 0.0, %v2259
        %2261 = vdwg.mxu0
        %2262 = vmatpush.msra.mxu0 %v2224
        %2263 = vmatpush.msra.mxu0 %v2223
        %2264 = vmatpush.msra.mxu0 %v2222
        %2265 = vmatpush.msra.mxu0 %v2221
        %2266 = vmatpush.msra.mxu0 %v2220
        %2267 = vmatpush.msra.mxu0 %v2219
        %2268 = vmatpush.msra.mxu0 %v2218
        %2269 = vmatpush.msra.mxu0 %v2217
        %2270 = vmatpush.msra.mxu0 %v2216
        %2271 = vmatpush.msra.mxu0 %v2215
        %2272 = vmatpush.msra.mxu0 %v2214
        %2273 = vmatpush.msra.mxu0 %v2213
        %2274 = vmatpush.msra.mxu0 %v2212
        %2275 = vmatpush.msra.mxu0 %v2211
        %2276 = vmatpush.msra.mxu0 %v2210
        %2277 = vmatpush.msra.mxu0 %v2209
        %2278 = vmatmul.f32.gmra.mxu0 %v2205
        %v2279 = vpop.f32.mrf.mxu0
        %v2280 = vadd.f32 %v2260, %v2279
        %2281 = vdwg.mxu0
        %s2282 = scalar_lea.vmem %s5, 256
        %v2283 = vld [vmem:[%s2282] sm:$0xff]
        %v2284 = vld [vmem:[%s2282 + $0x8] sm:$0xff]
        %v2285 = vld [vmem:[%s2282 + $0x10] sm:$0xff]
        %v2286 = vld [vmem:[%s2282 + $0x18] sm:$0xff]
        %v2287 = vld [vmem:[%s2282 + $0x20] sm:$0xff]
        %v2288 = vld [vmem:[%s2282 + $0x28] sm:$0xff]
        %v2289 = vld [vmem:[%s2282 + $0x30] sm:$0xff]
        %v2290 = vld [vmem:[%s2282 + $0x38] sm:$0xff]
        %v2291 = vld [vmem:[%s2282 + $0x40] sm:$0xff]
        %v2292 = vld [vmem:[%s2282 + $0x48] sm:$0xff]
        %v2293 = vld [vmem:[%s2282 + $0x50] sm:$0xff]
        %v2294 = vld [vmem:[%s2282 + $0x58] sm:$0xff]
        %v2295 = vld [vmem:[%s2282 + $0x60] sm:$0xff]
        %v2296 = vld [vmem:[%s2282 + $0x68] sm:$0xff]
        %v2297 = vld [vmem:[%s2282 + $0x70] sm:$0xff]
        %v2298 = vld [vmem:[%s2282 + $0x78] sm:$0xff]
        %2299 = vmatpush.msra.mxu0 %v2298
        %2300 = vmatpush.msra.mxu0 %v2297
        %2301 = vmatpush.msra.mxu0 %v2296
        %2302 = vmatpush.msra.mxu0 %v2295
        %2303 = vmatpush.msra.mxu0 %v2294
        %2304 = vmatpush.msra.mxu0 %v2293
        %2305 = vmatpush.msra.mxu0 %v2292
        %2306 = vmatpush.msra.mxu0 %v2291
        %2307 = vmatpush.msra.mxu0 %v2290
        %2308 = vmatpush.msra.mxu0 %v2289
        %2309 = vmatpush.msra.mxu0 %v2288
        %2310 = vmatpush.msra.mxu0 %v2287
        %2311 = vmatpush.msra.mxu0 %v2286
        %2312 = vmatpush.msra.mxu0 %v2285
        %2313 = vmatpush.msra.mxu0 %v2284
        %2314 = vmatpush.msra.mxu0 %v2283
        %2315 = vmatmul.f32.gmra.mxu0 %v2207
        %v2316 = vpop.f32.mrf.mxu0
        %v2317 = vadd.f32 0.0, %v2316
        %2318 = vdwg.mxu0
        %v2319 = vadd.f32 %v2280, %v2317
        %s2320 = scalar_lea.vmem %s5, 384
        %v2321 = vld [vmem:[%s2320] sm:$0xff]
        %v2322 = vld [vmem:[%s2320 + $0x8] sm:$0xff]
        %v2323 = vld [vmem:[%s2320 + $0x10] sm:$0xff]
        %v2324 = vld [vmem:[%s2320 + $0x18] sm:$0xff]
        %v2325 = vld [vmem:[%s2320 + $0x20] sm:$0xff]
        %v2326 = vld [vmem:[%s2320 + $0x28] sm:$0xff]
        %v2327 = vld [vmem:[%s2320 + $0x30] sm:$0xff]
        %v2328 = vld [vmem:[%s2320 + $0x38] sm:$0xff]
        %v2329 = vld [vmem:[%s2320 + $0x40] sm:$0xff]
        %v2330 = vld [vmem:[%s2320 + $0x48] sm:$0xff]
        %v2331 = vld [vmem:[%s2320 + $0x50] sm:$0xff]
        %v2332 = vld [vmem:[%s2320 + $0x58] sm:$0xff]
        %v2333 = vld [vmem:[%s2320 + $0x60] sm:$0xff]
        %v2334 = vld [vmem:[%s2320 + $0x68] sm:$0xff]
        %v2335 = vld [vmem:[%s2320 + $0x70] sm:$0xff]
        %v2336 = vld [vmem:[%s2320 + $0x78] sm:$0xff]
        %2337 = vmatpush.msra.mxu0 %v2336
        %2338 = vmatpush.msra.mxu0 %v2335
        %2339 = vmatpush.msra.mxu0 %v2334
        %2340 = vmatpush.msra.mxu0 %v2333
        %2341 = vmatpush.msra.mxu0 %v2332
        %2342 = vmatpush.msra.mxu0 %v2331
        %2343 = vmatpush.msra.mxu0 %v2330
        %2344 = vmatpush.msra.mxu0 %v2329
        %2345 = vmatpush.msra.mxu0 %v2328
        %2346 = vmatpush.msra.mxu0 %v2327
        %2347 = vmatpush.msra.mxu0 %v2326
        %2348 = vmatpush.msra.mxu0 %v2325
        %2349 = vmatpush.msra.mxu0 %v2324
        %2350 = vmatpush.msra.mxu0 %v2323
        %2351 = vmatpush.msra.mxu0 %v2322
        %2352 = vmatpush.msra.mxu0 %v2321
        %2353 = vmatmul.f32.gmra.mxu0 %v2208
        %v2354 = vpop.f32.mrf.mxu0
        %v2355 = vadd.f32 0.0, %v2354
        %2356 = vdwg.mxu0
        %v2357 = vadd.f32 %v2319, %v2355
        %v2358 = vld [vmem:[%s6] sm:$0x1]
        %v2360 = vperm.slane %v2358, 0
        %v2362 = vadd.f32 %v2357, %v2360
        %v2363 = vmax.f32 %v2362, 0.0
        %v2364 = vld [vmem:[%s7] sm:$0xff]
        %v2365 = vld [vmem:[%s7 + $0x8] sm:$0xff]
        %v2366 = vld [vmem:[%s7 + $0x10] sm:$0xff]
        %v2367 = vld [vmem:[%s7 + $0x18] sm:$0xff]
        %v2368 = vld [vmem:[%s8] sm:$0x1]
        %v2370 = vperm.slane %v2368, 0
        %vm2372 = vcmask 261120
        %v2374 = vsel %vm2372, %v2363, 0
        %2376 = vmatpush.msra.mxu0 0.0
        %2377 = vmatpush.msra.mxu0 0.0
        %2378 = vmatpush.msra.mxu0 0.0
        %2379 = vmatpush.msra.mxu0 0.0
        %2380 = vmatpush.msra.mxu0 0.0
        %2381 = vmatpush.msra.mxu0 0.0
        %2382 = vmatpush.msra.mxu0 0.0
        %2383 = vmatpush.msra.mxu0 0.0
        %2384 = vmatpush.msra.mxu0 0.0
        %2385 = vmatpush.msra.mxu0 0.0
        %2386 = vmatpush.msra.mxu0 0.0
        %2387 = vmatpush.msra.mxu0 0.0
        %2388 = vmatpush.msra.mxu0 %v2367
        %2389 = vmatpush.msra.mxu0 %v2366
        %2390 = vmatpush.msra.mxu0 %v2365
        %2391 = vmatpush.msra.mxu0 %v2364
        %2392 = vmatmul.f32.gmra.mxu0 %v2374
        %v2393 = vpop.f32.mrf.mxu0
        %v2394 = vadd.f32 %v2370, %v2393
        %2395 = vdwg.mxu0
        %2396 = vst [vmem:[%s325] sm:$0xff] %v2394
        %s2397 = sand.u32 %s225, 1
        %s2398 = scalar_lea.sflag [#allocation5], %s2397
        %s2399 = sand.u32 %s225, 1
        %s2400 = smul.addr %s2399, 8
        %s2401 = scalar_lea.vmem [#allocation4], %s2400
        // Predicated region
        $region57: #{cnn_forward.1} parent=55 // pred_check
          %p2402 = pneg %p235
        $region58: #{cnn_forward.1} parent=55 // pred_check_branch
          %2404 = sbr.rel (%p2402) target = $region60
        $region59: #{cnn_forward.1} parent=55 // pred_region
          %2406 = vsyncadd %s2398, 0
          %s2407 = smul.addr %s23, 8
          %s2408 = scalar_lea.hbm %s9, %s2407
          %s2410 = sshll.u32 %s2401, 4
          %s2411 = int_to_ptr.vmem [resolvable:$true] %s2410
          %s2412 = sshll.u32 %s2408, 4
          %s2413 = int_to_ptr.hbm [resolvable:$true] %s2412
          %2415 = dma.vmem_to_hbm [thread:$0]  %s2411, 128, %s2413, %s2398
        $region60: #{cnn_forward.1} parent=55 // pred_fallthru
          _
      $region56: #{cnn_forward.1} parent=5 // pred_fallthru
        _
      %p2416 = scmp.le.s32.totalorder 2, %s18
      // Predicated region
      $region61: #{cnn_forward.1} parent=5 // pred_check
        %p2417 = pneg %p2416
      $region62: #{cnn_forward.1} parent=5 // pred_check_branch
        %2419 = sbr.rel (%p2417) target = $region64
      $region63: #{cnn_forward.1} parent=5 // pred_region
        %s2420 = ssub.s32 %s18, 2
        // Predicated region
        $region65: #{cnn_forward.1} parent=63 // pred_check
          %p2421 = pneg %p241
        $region66: #{cnn_forward.1} parent=63 // pred_check_branch
          %2423 = sbr.rel (%p2421) target = $region68
        $region67: #{cnn_forward.1} parent=63 // pred_region
          %s2424 = sand.u32 %s226, 1
          %s2425 = scalar_lea.sflag [#allocation5], %s2424
          %s2426 = sand.u32 %s226, 1
          %s2427 = smul.addr %s2426, 8
          %s2428 = scalar_lea.vmem [#allocation4], %s2427
          %2430 = dma.done %s2425, 128
        $region68: #{cnn_forward.1} parent=63 // pred_fallthru
          _
      $region64: #{cnn_forward.1} parent=5 // pred_fallthru
        _
    $region6: #{cnn_forward.1} parent=1 // loop_footer
      %s22 = sadd.s32 1, %s18
    $region7: #{cnn_forward.1} parent=1 // loop_footer_branch
      %17 = sbr.rel target = $region3
    $region8: #{cnn_forward.1} parent=1 // loop_exit
      _
    %2431 = vsyncpa [#allocation5], 1
    %s2432 = scalar_lea.sflag [#allocation5], 1
    %2433 = vsyncpa %s2432, 1

</llo_original>
